<compile_context>
chip_gen: v7x
topology: tpu7x:2x2x1
jax: 0.10.0
libtpu: 0.0.40
codegen_flags: <defaults>
</compile_context>

<pallas_src>
import functools
import jax
import jax.numpy as jnp
from jax import lax
from jax.experimental import pallas as pl
from jax.experimental.pallas import tpu as pltpu


def _round_up(x, m):
    return (x + m - 1) // m * m


def _mxu_depth():
    """MXU array depth: 256 on v6e/v7x, 128 otherwise (conservative fallback)."""
    try:
        kind = jax.devices()[0].device_kind.lower()
    except Exception:
        return 128
    return 256 if ("v6" in kind or "v7" in kind) else 128


# ----------------------------------------------------------------------------
# Plain-JAX glue: furthest point sampling + ball-query grouping
# ----------------------------------------------------------------------------
def furthest_point_sample(xyz, npoint):
    """xyz: (B, N, 3) -> (B, npoint) int32 indices (CUDA FPS semantics)."""
    # TODO(synk): move to a Pallas kernel keeping dists/xyz resident in VMEM
    #             across the npoint iterations (grid over B).
    B, N, _ = xyz.shape
    barange = jnp.arange(B)

    def body(i, state):
        dists, idxs, last_idx = state
        last_pt = xyz[barange, last_idx]                         # (B, 3)
        d = jnp.sum((xyz - last_pt[:, None, :]) ** 2, axis=-1)   # (B, N)
        dists = jnp.minimum(dists, d)
        nxt = jnp.argmax(dists, axis=-1).astype(jnp.int32)       # (B,)
        idxs = idxs.at[:, i].set(nxt)
        return dists, idxs, nxt

    dists = jnp.full((B, N), 1e10, jnp.float32)
    idxs = jnp.zeros((B, npoint), jnp.int32)                     # first sample = idx 0
    last = jnp.zeros((B,), jnp.int32)
    _, idxs, _ = lax.fori_loop(1, npoint, body, (dists, idxs, last))
    return idxs


def query_and_group(xyz, new_xyz, features, radius, nsample, cin_pad, g_pack, p_pad):
    """Ball query + grouping (QueryAndGroup, use_xyz=True), emitted directly in
    the kernel's packed layout.

    xyz: (B, N, 3), new_xyz: (B, P, 3), features: (B, C, N) or None
    Returns (B, nsample // g_pack, g_pack * cin_pad, p_pad) bf16, where within
    each packed group the channels are [nbr0: rel_xyz(3)+feat(C)+0pad, nbr1: ..., ...].
    """
    B, N, _ = xyz.shape
    P = new_xyz.shape[1]
    C = 0 if features is None else features.shape[1]

    d2 = jnp.sum((new_xyz[:, :, None, :] - xyz[:, None, :, :]) ** 2, axis=-1)  # (B,P,N)
    in_r = d2 < radius * radius
    # First `nsample` in-radius indices in ascending index order (CUDA ball_query
    # semantics) via top_k on a rank key; short groups padded with the first hit.
    key = jnp.where(in_r, N - jnp.arange(N, dtype=jnp.int32)[None, None, :], 0)
    vals, idx = lax.top_k(key, nsample)                          # (B, P, S)
    idx = idx.astype(jnp.int32)
    idx = jnp.where(vals > 0, idx, idx[..., :1])

    # Gather with P trailing (no XLA transpose of the Sx-expanded tensor).
    idx_t = jnp.transpose(idx, (0, 2, 1))[:, :, None, :]         # (B, S, 1, P)
    xyz_t = jnp.transpose(xyz, (0, 2, 1))                        # (B, 3, N)  (tiny)
    new_xyz_t = jnp.transpose(new_xyz, (0, 2, 1))                # (B, 3, P)  (tiny)

    g_xyz = jnp.take_along_axis(xyz_t[:, None], idx_t, axis=-1) - new_xyz_t[:, None]
    if features is not None:
        g_feat = jnp.take_along_axis(features[:, None], idx_t, axis=-1)   # (B,S,C,P)
        g = jnp.concatenate([g_xyz, g_feat], axis=2)             # (B, S, 3+C, P)
    else:
        g = g_xyz                                                # (B, S, 3, P)
    if cin_pad > 3 + C:
        g = jnp.pad(g, ((0, 0), (0, 0), (0, cin_pad - (3 + C)), (0, 0)))
    if p_pad > P:
        g = jnp.pad(g, ((0, 0), (0, 0), (0, 0), (0, p_pad - P)))
    # Leading-dims collapse (layout-preserving; cin_pad % 8 == 0) into packed groups.
    g = g.reshape(B, nsample // g_pack, g_pack * cin_pad, p_pad)
    return g.astype(jnp.bfloat16)


# ----------------------------------------------------------------------------
# Pallas kernel: block-diag packed MLP (folded BN + ReLU) + max-pool over neighbors
# ----------------------------------------------------------------------------
def _make_msg_kernel(n_layers, g_pack, cout_pad):
    def kernel(x_ref, *refs):
        params = refs[:2 * n_layers]          # (W_bd, shift_bd) per layer
        out_ref = refs[2 * n_layers]
        acc_ref = refs[2 * n_layers + 1]      # (cout_pad, TILE_P) f32 running max
        gi = pl.program_id(2)                 # neighbor-group (reduction) axis

        @pl.when(gi == 0)
        def _():
            acc_ref[...] = jnp.zeros_like(acc_ref)   # outputs are post-ReLU (>= 0)

        h = x_ref[0, 0]                                   # (G*Cin_pad, TILE_P) bf16
        for l in range(n_layers):                         # one big matmul per layer
            w = params[2 * l][...]                        # (G*Cout_l, G*Cin_l) bf16
            shift = params[2 * l + 1][...]                # (G*Cout_l, 1) f32 (hoisted)
            h = jnp.dot(w, h, preferred_element_type=jnp.float32)
            h = jnp.maximum(h + shift, 0.0)               # folded-BN shift + ReLU
            if l + 1 < n_layers:
                h = h.astype(jnp.bfloat16)                # bf16 MXU inputs

        # Max over the G neighbor sub-blocks (static sublane-aligned slices).
        m = h[:cout_pad]
        for j in range(1, g_pack):
            m = jnp.maximum(m, h[j * cout_pad:(j + 1) * cout_pad])
        acc_ref[...] = jnp.maximum(acc_ref[...], m)

        @pl.when(gi == pl.num_programs(2) - 1)
        def _():
            out_ref[0] = acc_ref[...].astype(out_ref.dtype)   # lane-dense store
    return kernel


def _choose_tile_p(batch, p_pad, gcin, cout_pad, param_bytes, out_itemsize,
                   budget=32 * 2 ** 20):
    """Largest 128-multiple tile of p_pad whose double-buffered footprint fits."""
    def fits(tp):
        inp = gcin * tp * 2                       # bf16 input block
        out = cout_pad * tp * out_itemsize        # output block
        acc = cout_pad * tp * 4                   # f32 accumulator scratch
        return 2 * (inp + out + param_bytes) + acc <= budget

    cands = [t for t in range(p_pad, 0, -128) if p_pad % t == 0]
    # Keep >= 2 parallel grid steps when batch == 1 (v7x has 2 TensorCores).
    if batch == 1 and len(cands) > 1 and cands[0] == p_pad:
        cands = cands[1:]
    for t in cands:
        if fits(t):
            return t
    return 128


def shared_mlp_maxpool(g, weights_bd, shifts_bd, g_pack, out_dtype=jnp.float32):
    """g: (B, n_groups, G*Cin_pad, P_pad) bf16 -> (B, cout_pad, P_pad) out_dtype."""
    B, n_groups, gcin, p_pad = g.shape
    n_layers = len(weights_bd)
    gcout = weights_bd[-1].shape[0]
    cout_pad = gcout // g_pack
    out_itemsize = jnp.dtype(out_dtype).itemsize
    param_bytes = sum(int(w.size) * 2 + int(s.size) * 4
                      for w, s in zip(weights_bd, shifts_bd))
    tile_p = _choose_tile_p(B, p_pad, gcin, cout_pad, param_bytes, out_itemsize)
    n_pt = p_pad // tile_p

    in_specs = [pl.BlockSpec((1, 1, gcin, tile_p), lambda b, p, gi: (b, gi, 0, p))]
    flat = []
    for w, s in zip(weights_bd, shifts_bd):
        in_specs.append(pl.BlockSpec(w.shape, lambda b, p, gi: (0, 0)))
        in_specs.append(pl.BlockSpec(s.shape, lambda b, p, gi: (0, 0)))
        flat += [w, s]

    # Explicit VMEM budget: double-buffered input/output/param blocks + acc scratch
    # + headroom; capped to stay v7x-safe (64 MiB physical VMEM).
    vmem_bytes = (2 * (gcin * tile_p * 2 + cout_pad * tile_p * out_itemsize + param_bytes)
                  + cout_pad * tile_p * 4 + (8 << 20))
    vmem_bytes = int(min(vmem_bytes, 48 << 20))

    return pl.pallas_call(
        _make_msg_kernel(n_layers, g_pack, cout_pad),
        out_shape=jax.ShapeDtypeStruct((B, cout_pad, p_pad), out_dtype),
        grid=(B, n_pt, n_groups),
        in_specs=in_specs,
        out_specs=pl.BlockSpec((1, cout_pad, tile_p), lambda b, p, gi: (b, 0, p)),
        scratch_shapes=[pltpu.VMEM((cout_pad, tile_p), jnp.float32)],
        compiler_params=pltpu.CompilerParams(
            dimension_semantics=("parallel", "parallel", "arbitrary"),
            vmem_limit_bytes=vmem_bytes),
    )(g, *flat)


# ----------------------------------------------------------------------------
# Module forward: _PointnetSAModuleBase.forward equivalent
# ----------------------------------------------------------------------------
def pointnet_sa_forward(xyz, features, npoint, radii, nsamples, mlp_params):
    """Returns (new_xyz (B, npoint, 3), new_features (B, sum(mlp[-1]), npoint))."""
    B = xyz.shape[0]
    fps_idx = furthest_point_sample(xyz, npoint)
    new_xyz = xyz[jnp.arange(B)[:, None], fps_idx]               # (B, npoint, 3)
    p_pad = _round_up(npoint, 128)                               # lane-dense output tiles

    outs = []
    for radius, nsample, params in zip(radii, nsamples, mlp_params):
        ws_bd, shifts_bd, g_pack, cin_pad, cout = params
        g = query_and_group(xyz, new_xyz, features, radius, nsample,
                            cin_pad, g_pack, p_pad)
        o = shared_mlp_maxpool(g, ws_bd, shifts_bd, g_pack)      # (B, cout_pad, p_pad)
        outs.append(o[:, :cout, :npoint])
    # TODO(synk): fuse the MSG branches into one pallas_call writing channel slices
    #             of a single concatenated output to drop this XLA concat copy.
    return new_xyz, jnp.concatenate(outs, axis=1)


# ----------------------------------------------------------------------------
# Deterministic parameter init: Conv2d 1x1 + folded eval-mode BN, block-diag packed
# ----------------------------------------------------------------------------
def init_mlp_params(key, channel_spec, nsample, eps=1e-5):
    """Returns (weights_bd bf16, shifts_bd f32, g_pack, cin_pad, cout_last).

    Every layer's channels are zero-padded to a multiple of 8 (sublane), BN scale
    is folded into the weights (exact in eval mode), and G = g_pack neighbors are
    packed into block-diagonal weights sized for the local MXU array depth.
    """
    depth = _mxu_depth()
    pads = [_round_up(c, 8) for c in channel_spec]

    base_w, base_s = [], []
    for i in range(len(channel_spec) - 1):
        cin, cout = channel_spec[i], channel_spec[i + 1]
        cin_p, cout_p = pads[i], pads[i + 1]
        key, k1, k2, k3, k4 = jax.random.split(key, 5)
        w = jax.random.normal(k1, (cout, cin), jnp.float32) * (1.0 / (cin ** 0.5))
        gamma = 1.0 + 0.1 * jax.random.normal(k2, (cout,), jnp.float32)
        beta = 0.1 * jax.random.normal(k3, (cout,), jnp.float32)
        mean = 0.1 * jax.random.normal(k4, (cout,), jnp.float32)
        var = jnp.ones((cout,), jnp.float32)
        scale = gamma / jnp.sqrt(var + eps)                      # eval-mode BN
        shift = beta - mean * scale
        w = w * scale[:, None]                                   # fold BN scale
        wp = jnp.zeros((cout_p, cin_p), jnp.float32).at[:cout, :cin].set(w)
        sp = jnp.zeros((cout_p, 1), jnp.float32).at[:cout, 0].set(shift)
        base_w.append(wp)
        base_s.append(sp)

    # Neighbor packing factor: G*Cin_l and G*Cout_l must fit the MXU array depth,
    # and G must divide nsample.
    max_dim = max(pads)
    g_pack = max(1, min(nsample, depth // max_dim))
    while nsample % g_pack:
        g_pack -= 1

    weights_bd, shifts_bd = [], []
    for wp, sp in zip(base_w, base_s):
        wbd = jnp.kron(jnp.eye(g_pack, dtype=jnp.float32), wp)   # block-diag (G*co, G*ci)
        sbd = jnp.tile(sp, (g_pack, 1))                          # (G*co, 1)
        weights_bd.append(wbd.astype(jnp.bfloat16))
        shifts_bd.append(sbd.astype(jnp.float32))
    return weights_bd, shifts_bd, g_pack, pads[0], channel_spec[-1]


if __name__ == "__main__":
    key = jax.random.PRNGKey(0)
    B, N, C = 2, 64, 4
    npoint = 16
    radii = [0.2, 0.4]
    nsamples = [8, 16]
    mlp_specs = [[3 + C, 16, 32], [3 + C, 16, 32]]               # MSG-style, 2 groupers

    k_xyz, k_feat, k_p = jax.random.split(key, 3)
    xyz = jax.random.uniform(k_xyz, (B, N, 3), jnp.float32)
    features = jax.random.normal(k_feat, (B, C, N), jnp.float32)

    mlp_params = []
    for spec, ns in zip(mlp_specs, nsamples):
        k_p, sub = jax.random.split(k_p)
        mlp_params.append(init_mlp_params(sub, spec, ns))

    fwd = jax.jit(functools.partial(
        pointnet_sa_forward, npoint=npoint, radii=radii,
        nsamples=nsamples, mlp_params=mlp_params))
    new_xyz, new_features = fwd(xyz, features)
    jax.block_until_ready((new_xyz, new_features))

    assert new_xyz.shape == (B, npoint, 3)
    assert new_features.shape == (B, sum(s[-1] for s in mlp_specs), npoint)
    assert bool(jnp.all(jnp.isfinite(new_xyz)))
    assert bool(jnp.all(jnp.isfinite(new_features)))
    print("KERNEL_OK")
</pallas_src>

<mosaic_0001>
module attributes {stable_mosaic.version = 11 : i64} {
  func.func @kernel(%arg0: i32, %arg1: i32, %arg2: i32, %arg3: memref<1x1x32x128xbf16, #tpu.memory_space<vmem>>, %arg4: memref<64x32xbf16, #tpu.memory_space<vmem>>, %arg5: memref<64x1xf32, #tpu.memory_space<vmem>>, %arg6: memref<128x64xbf16, #tpu.memory_space<vmem>>, %arg7: memref<128x1xf32, #tpu.memory_space<vmem>>, %arg8: memref<1x32x128xf32, #tpu.memory_space<vmem>>, %arg9: memref<32x128xf32, #tpu.memory_space<vmem>>) attributes {dimension_semantics = [#tpu.dimension_semantics<parallel>, #tpu.dimension_semantics<parallel>, #tpu.dimension_semantics<arbitrary>], iteration_bounds = array<i64: 2, 1, 2>, scalar_prefetch = 0 : i64, scratch_operands = 1 : i64, tpu.core_type = #tpu.core_type<tc>, window_params = [{transform_indices = @transform_0, window_bounds = array<i64: 1, 1, 32, 128>}, {pipeline_mode = #tpu.pipeline_mode<synchronous>, transform_indices = @transform_1, window_bounds = array<i64: 64, 32>}, {pipeline_mode = #tpu.pipeline_mode<synchronous>, transform_indices = @transform_2, window_bounds = array<i64: 64, 1>}, {pipeline_mode = #tpu.pipeline_mode<synchronous>, transform_indices = @transform_3, window_bounds = array<i64: 128, 64>}, {pipeline_mode = #tpu.pipeline_mode<synchronous>, transform_indices = @transform_4, window_bounds = array<i64: 128, 1>}, {transform_indices = @transform_5, window_bounds = array<i64: 1, 32, 128>}]} {
    %c0_i32 = arith.constant 0 : i32
    %0 = arith.cmpi eq, %arg2, %c0_i32 : i32
    %1 = arith.extui %0 : i1 to i32
    %c0_i32_0 = arith.constant 0 : i32
    %2 = arith.cmpi ne, %1, %c0_i32_0 : i32
    scf.if %2 {
      %cst_20 = arith.constant 0.000000e+00 : f32
      %33 = vector.broadcast %cst_20 : f32 to vector<32x128xf32>
      %c0_21 = arith.constant 0 : index
      %c0_22 = arith.constant 0 : index
      %34 = vector.load %arg9[%c0_21, %c0_22] : memref<32x128xf32, #tpu.memory_space<vmem>>, vector<32x128xf32>
      tpu.vector_store %arg9[%c0_21, %c0_22], %33 {strides = array<i32>} : memref<32x128xf32, #tpu.memory_space<vmem>>, vector<32x128xf32>,
    } else {
    }
    %c0 = arith.constant 0 : index
    %c0_1 = arith.constant 0 : index
    %c0_2 = arith.constant 0 : index
    %c0_3 = arith.constant 0 : index
    %3 = vector.load %arg3[%c0, %c0_1, %c0_2, %c0_3] : memref<1x1x32x128xbf16, #tpu.memory_space<vmem>>, vector<1x1x32x128xbf16>
    %4 = vector.shape_cast %3 : vector<1x1x32x128xbf16> to vector<32x128xbf16>
    %c0_4 = arith.constant 0 : index
    %c0_5 = arith.constant 0 : index
    %5 = vector.load %arg4[%c0_4, %c0_5] : memref<64x32xbf16, #tpu.memory_space<vmem>>, vector<64x32xbf16>
    %c0_6 = arith.constant 0 : index
    %c0_7 = arith.constant 0 : index
    %6 = vector.load %arg5[%c0_6, %c0_7] : memref<64x1xf32, #tpu.memory_space<vmem>>, vector<64x1xf32>
    %cst = arith.constant dense<0.000000e+00> : vector<64x128xf32>
    %7 = tpu.matmul %5, %4, %cst {dimension_numbers = #tpu.dot_dimension_numbers<[1], [0], [0], [1], [0, 0, 1, 1], [], []>} : vector<64x32xbf16>, vector<32x128xbf16>, vector<64x128xf32> -> vector<64x128xf32>
    %8 = vector.broadcast %6 : vector<64x1xf32> to vector<64x128xf32>
    %9 = arith.addf %7, %8 : vector<64x128xf32>
    %cst_8 = arith.constant 0.000000e+00 : f32
    %10 = vector.broadcast %cst_8 : f32 to vector<64x128xf32>
    %11 = arith.maximumf %9, %10 : vector<64x128xf32>
    %12 = arith.truncf %11 : vector<64x128xf32> to vector<64x128xbf16>
    %c0_9 = arith.constant 0 : index
    %c0_10 = arith.constant 0 : index
    %13 = vector.load %arg6[%c0_9, %c0_10] : memref<128x64xbf16, #tpu.memory_space<vmem>>, vector<128x64xbf16>
    %c0_11 = arith.constant 0 : index
    %c0_12 = arith.constant 0 : index
    %14 = vector.load %arg7[%c0_11, %c0_12] : memref<128x1xf32, #tpu.memory_space<vmem>>, vector<128x1xf32>
    %cst_13 = arith.constant dense<0.000000e+00> : vector<128x128xf32>
    %15 = tpu.matmul %13, %12, %cst_13 {dimension_numbers = #tpu.dot_dimension_numbers<[1], [0], [0], [1], [0, 0, 1, 1], [], []>} : vector<128x64xbf16>, vector<64x128xbf16>, vector<128x128xf32> -> vector<128x128xf32>
    %16 = vector.broadcast %14 : vector<128x1xf32> to vector<128x128xf32>
    %17 = arith.addf %15, %16 : vector<128x128xf32>
    %cst_14 = arith.constant 0.000000e+00 : f32
    %18 = vector.broadcast %cst_14 : f32 to vector<128x128xf32>
    %19 = arith.maximumf %17, %18 : vector<128x128xf32>
    %20 = vector.extract_strided_slice %19 {offsets = [0, 0], sizes = [32, 128], strides = [1, 1]} : vector<128x128xf32> to vector<32x128xf32>
    %21 = vector.extract_strided_slice %19 {offsets = [32, 0], sizes = [32, 128], strides = [1, 1]} : vector<128x128xf32> to vector<32x128xf32>
    %22 = arith.maximumf %20, %21 : vector<32x128xf32>
    %23 = vector.extract_strided_slice %19 {offsets = [64, 0], sizes = [32, 128], strides = [1, 1]} : vector<128x128xf32> to vector<32x128xf32>
    %24 = arith.maximumf %22, %23 : vector<32x128xf32>
    %25 = vector.extract_strided_slice %19 {offsets = [96, 0], sizes = [32, 128], strides = [1, 1]} : vector<128x128xf32> to vector<32x128xf32>
    %26 = arith.maximumf %24, %25 : vector<32x128xf32>
    %c0_15 = arith.constant 0 : index
    %c0_16 = arith.constant 0 : index
    %27 = vector.load %arg9[%c0_15, %c0_16] : memref<32x128xf32, #tpu.memory_space<vmem>>, vector<32x128xf32>
    %28 = arith.maximumf %27, %26 : vector<32x128xf32>
    %c0_17 = arith.constant 0 : index
    %c0_18 = arith.constant 0 : index
    %29 = vector.load %arg9[%c0_17, %c0_18] : memref<32x128xf32, #tpu.memory_space<vmem>>, vector<32x128xf32>
    tpu.vector_store %arg9[%c0_17, %c0_18], %28 {strides = array<i32>} : memref<32x128xf32, #tpu.memory_space<vmem>>, vector<32x128xf32>,
    %c1_i32 = arith.constant 1 : i32
    %30 = arith.cmpi eq, %arg2, %c1_i32 : i32
    %31 = arith.extui %30 : i1 to i32
    %c0_i32_19 = arith.constant 0 : i32
    %32 = arith.cmpi ne, %31, %c0_i32_19 : i32
    scf.if %32 {
      %c0_20 = arith.constant 0 : index
      %c0_21 = arith.constant 0 : index
      %33 = vector.load %arg9[%c0_20, %c0_21] : memref<32x128xf32, #tpu.memory_space<vmem>>, vector<32x128xf32>
      %c0_22 = arith.constant 0 : index
      %c0_23 = arith.constant 0 : index
      %c0_24 = arith.constant 0 : index
      %34 = vector.load %arg8[%c0_22, %c0_23, %c0_24] : memref<1x32x128xf32, #tpu.memory_space<vmem>>, vector<1x32x128xf32>
      %35 = vector.shape_cast %34 : vector<1x32x128xf32> to vector<32x128xf32>
      %36 = vector.shape_cast %33 : vector<32x128xf32> to vector<1x32x128xf32>
      tpu.vector_store %arg8[%c0_22, %c0_23, %c0_24], %36 {strides = array<i32>} : memref<1x32x128xf32, #tpu.memory_space<vmem>>, vector<1x32x128xf32>,
    } else {
    }
    return
  }
  func.func @transform_0(%arg0: i32, %arg1: i32, %arg2: i32) -> (i32, i32, i32, i32) {
    %c0_i32 = arith.constant 0 : i32
    %c0_i32_0 = arith.constant 0 : i32
    return %arg0, %arg2, %c0_i32, %arg1 : i32, i32, i32, i32
  }
  func.func @transform_1(%arg0: i32, %arg1: i32, %arg2: i32) -> (i32, i32) {
    %c0_i32 = arith.constant 0 : i32
    %c0_i32_0 = arith.constant 0 : i32
    %c0_i32_1 = arith.constant 0 : i32
    return %c0_i32, %c0_i32_0 : i32, i32
  }
  func.func @transform_2(%arg0: i32, %arg1: i32, %arg2: i32) -> (i32, i32) {
    %c0_i32 = arith.constant 0 : i32
    %c0_i32_0 = arith.constant 0 : i32
    %c0_i32_1 = arith.constant 0 : i32
    return %c0_i32, %c0_i32_0 : i32, i32
  }
  func.func @transform_3(%arg0: i32, %arg1: i32, %arg2: i32) -> (i32, i32) {
    %c0_i32 = arith.constant 0 : i32
    %c0_i32_0 = arith.constant 0 : i32
    %c0_i32_1 = arith.constant 0 : i32
    return %c0_i32, %c0_i32_0 : i32, i32
  }
  func.func @transform_4(%arg0: i32, %arg1: i32, %arg2: i32) -> (i32, i32) {
    %c0_i32 = arith.constant 0 : i32
    %c0_i32_0 = arith.constant 0 : i32
    %c0_i32_1 = arith.constant 0 : i32
    return %c0_i32, %c0_i32_0 : i32, i32
  }
  func.func @transform_5(%arg0: i32, %arg1: i32, %arg2: i32) -> (i32, i32, i32) {
    %c0_i32 = arith.constant 0 : i32
    %c0_i32_0 = arith.constant 0 : i32
    return %arg0, %c0_i32, %arg1 : i32, i32, i32
  }
}

module attributes {stable_mosaic.version = 11 : i64} {
  func.func @kernel(%arg0: i32, %arg1: i32, %arg2: i32, %arg3: memref<1x1x32x128xbf16, #tpu.memory_space<vmem>>, %arg4: memref<64x32xbf16, #tpu.memory_space<vmem>>, %arg5: memref<64x1xf32, #tpu.memory_space<vmem>>, %arg6: memref<128x64xbf16, #tpu.memory_space<vmem>>, %arg7: memref<128x1xf32, #tpu.memory_space<vmem>>, %arg8: memref<1x32x128xf32, #tpu.memory_space<vmem>>, %arg9: memref<32x128xf32, #tpu.memory_space<vmem>>) attributes {dimension_semantics = [#tpu.dimension_semantics<parallel>, #tpu.dimension_semantics<parallel>, #tpu.dimension_semantics<arbitrary>], iteration_bounds = array<i64: 2, 1, 4>, scalar_prefetch = 0 : i64, scratch_operands = 1 : i64, tpu.core_type = #tpu.core_type<tc>, window_params = [{transform_indices = @transform_0, window_bounds = array<i64: 1, 1, 32, 128>}, {pipeline_mode = #tpu.pipeline_mode<synchronous>, transform_indices = @transform_1, window_bounds = array<i64: 64, 32>}, {pipeline_mode = #tpu.pipeline_mode<synchronous>, transform_indices = @transform_2, window_bounds = array<i64: 64, 1>}, {pipeline_mode = #tpu.pipeline_mode<synchronous>, transform_indices = @transform_3, window_bounds = array<i64: 128, 64>}, {pipeline_mode = #tpu.pipeline_mode<synchronous>, transform_indices = @transform_4, window_bounds = array<i64: 128, 1>}, {transform_indices = @transform_5, window_bounds = array<i64: 1, 32, 128>}]} {
    %c0_i32 = arith.constant 0 : i32
    %0 = arith.cmpi eq, %arg2, %c0_i32 : i32
    %1 = arith.extui %0 : i1 to i32
    %c0_i32_0 = arith.constant 0 : i32
    %2 = arith.cmpi ne, %1, %c0_i32_0 : i32
    scf.if %2 {
      %cst_20 = arith.constant 0.000000e+00 : f32
      %33 = vector.broadcast %cst_20 : f32 to vector<32x128xf32>
      %c0_21 = arith.constant 0 : index
      %c0_22 = arith.constant 0 : index
      %34 = vector.load %arg9[%c0_21, %c0_22] : memref<32x128xf32, #tpu.memory_space<vmem>>, vector<32x128xf32>
      tpu.vector_store %arg9[%c0_21, %c0_22], %33 {strides = array<i32>} : memref<32x128xf32, #tpu.memory_space<vmem>>, vector<32x128xf32>,
    } else {
    }
    %c0 = arith.constant 0 : index
    %c0_1 = arith.constant 0 : index
    %c0_2 = arith.constant 0 : index
    %c0_3 = arith.constant 0 : index
    %3 = vector.load %arg3[%c0, %c0_1, %c0_2, %c0_3] : memref<1x1x32x128xbf16, #tpu.memory_space<vmem>>, vector<1x1x32x128xbf16>
    %4 = vector.shape_cast %3 : vector<1x1x32x128xbf16> to vector<32x128xbf16>
    %c0_4 = arith.constant 0 : index
    %c0_5 = arith.constant 0 : index
    %5 = vector.load %arg4[%c0_4, %c0_5] : memref<64x32xbf16, #tpu.memory_space<vmem>>, vector<64x32xbf16>
    %c0_6 = arith.constant 0 : index
    %c0_7 = arith.constant 0 : index
    %6 = vector.load %arg5[%c0_6, %c0_7] : memref<64x1xf32, #tpu.memory_space<vmem>>, vector<64x1xf32>
    %cst = arith.constant dense<0.000000e+00> : vector<64x128xf32>
    %7 = tpu.matmul %5, %4, %cst {dimension_numbers = #tpu.dot_dimension_numbers<[1], [0], [0], [1], [0, 0, 1, 1], [], []>} : vector<64x32xbf16>, vector<32x128xbf16>, vector<64x128xf32> -> vector<64x128xf32>
    %8 = vector.broadcast %6 : vector<64x1xf32> to vector<64x128xf32>
    %9 = arith.addf %7, %8 : vector<64x128xf32>
    %cst_8 = arith.constant 0.000000e+00 : f32
    %10 = vector.broadcast %cst_8 : f32 to vector<64x128xf32>
    %11 = arith.maximumf %9, %10 : vector<64x128xf32>
    %12 = arith.truncf %11 : vector<64x128xf32> to vector<64x128xbf16>
    %c0_9 = arith.constant 0 : index
    %c0_10 = arith.constant 0 : index
    %13 = vector.load %arg6[%c0_9, %c0_10] : memref<128x64xbf16, #tpu.memory_space<vmem>>, vector<128x64xbf16>
    %c0_11 = arith.constant 0 : index
    %c0_12 = arith.constant 0 : index
    %14 = vector.load %arg7[%c0_11, %c0_12] : memref<128x1xf32, #tpu.memory_space<vmem>>, vector<128x1xf32>
    %cst_13 = arith.constant dense<0.000000e+00> : vector<128x128xf32>
    %15 = tpu.matmul %13, %12, %cst_13 {dimension_numbers = #tpu.dot_dimension_numbers<[1], [0], [0], [1], [0, 0, 1, 1], [], []>} : vector<128x64xbf16>, vector<64x128xbf16>, vector<128x128xf32> -> vector<128x128xf32>
    %16 = vector.broadcast %14 : vector<128x1xf32> to vector<128x128xf32>
    %17 = arith.addf %15, %16 : vector<128x128xf32>
    %cst_14 = arith.constant 0.000000e+00 : f32
    %18 = vector.broadcast %cst_14 : f32 to vector<128x128xf32>
    %19 = arith.maximumf %17, %18 : vector<128x128xf32>
    %20 = vector.extract_strided_slice %19 {offsets = [0, 0], sizes = [32, 128], strides = [1, 1]} : vector<128x128xf32> to vector<32x128xf32>
    %21 = vector.extract_strided_slice %19 {offsets = [32, 0], sizes = [32, 128], strides = [1, 1]} : vector<128x128xf32> to vector<32x128xf32>
    %22 = arith.maximumf %20, %21 : vector<32x128xf32>
    %23 = vector.extract_strided_slice %19 {offsets = [64, 0], sizes = [32, 128], strides = [1, 1]} : vector<128x128xf32> to vector<32x128xf32>
    %24 = arith.maximumf %22, %23 : vector<32x128xf32>
    %25 = vector.extract_strided_slice %19 {offsets = [96, 0], sizes = [32, 128], strides = [1, 1]} : vector<128x128xf32> to vector<32x128xf32>
    %26 = arith.maximumf %24, %25 : vector<32x128xf32>
    %c0_15 = arith.constant 0 : index
    %c0_16 = arith.constant 0 : index
    %27 = vector.load %arg9[%c0_15, %c0_16] : memref<32x128xf32, #tpu.memory_space<vmem>>, vector<32x128xf32>
    %28 = arith.maximumf %27, %26 : vector<32x128xf32>
    %c0_17 = arith.constant 0 : index
    %c0_18 = arith.constant 0 : index
    %29 = vector.load %arg9[%c0_17, %c0_18] : memref<32x128xf32, #tpu.memory_space<vmem>>, vector<32x128xf32>
    tpu.vector_store %arg9[%c0_17, %c0_18], %28 {strides = array<i32>} : memref<32x128xf32, #tpu.memory_space<vmem>>, vector<32x128xf32>,
    %c3_i32 = arith.constant 3 : i32
    %30 = arith.cmpi eq, %arg2, %c3_i32 : i32
    %31 = arith.extui %30 : i1 to i32
    %c0_i32_19 = arith.constant 0 : i32
    %32 = arith.cmpi ne, %31, %c0_i32_19 : i32
    scf.if %32 {
      %c0_20 = arith.constant 0 : index
      %c0_21 = arith.constant 0 : index
      %33 = vector.load %arg9[%c0_20, %c0_21] : memref<32x128xf32, #tpu.memory_space<vmem>>, vector<32x128xf32>
      %c0_22 = arith.constant 0 : index
      %c0_23 = arith.constant 0 : index
      %c0_24 = arith.constant 0 : index
      %34 = vector.load %arg8[%c0_22, %c0_23, %c0_24] : memref<1x32x128xf32, #tpu.memory_space<vmem>>, vector<1x32x128xf32>
      %35 = vector.shape_cast %34 : vector<1x32x128xf32> to vector<32x128xf32>
      %36 = vector.shape_cast %33 : vector<32x128xf32> to vector<1x32x128xf32>
      tpu.vector_store %arg8[%c0_22, %c0_23, %c0_24], %36 {strides = array<i32>} : memref<1x32x128xf32, #tpu.memory_space<vmem>>, vector<1x32x128xf32>,
    } else {
    }
    return
  }
  func.func @transform_0(%arg0: i32, %arg1: i32, %arg2: i32) -> (i32, i32, i32, i32) {
    %c0_i32 = arith.constant 0 : i32
    %c0_i32_0 = arith.constant 0 : i32
    return %arg0, %arg2, %c0_i32, %arg1 : i32, i32, i32, i32
  }
  func.func @transform_1(%arg0: i32, %arg1: i32, %arg2: i32) -> (i32, i32) {
    %c0_i32 = arith.constant 0 : i32
    %c0_i32_0 = arith.constant 0 : i32
    %c0_i32_1 = arith.constant 0 : i32
    return %c0_i32, %c0_i32_0 : i32, i32
  }
  func.func @transform_2(%arg0: i32, %arg1: i32, %arg2: i32) -> (i32, i32) {
    %c0_i32 = arith.constant 0 : i32
    %c0_i32_0 = arith.constant 0 : i32
    %c0_i32_1 = arith.constant 0 : i32
    return %c0_i32, %c0_i32_0 : i32, i32
  }
  func.func @transform_3(%arg0: i32, %arg1: i32, %arg2: i32) -> (i32, i32) {
    %c0_i32 = arith.constant 0 : i32
    %c0_i32_0 = arith.constant 0 : i32
    %c0_i32_1 = arith.constant 0 : i32
    return %c0_i32, %c0_i32_0 : i32, i32
  }
  func.func @transform_4(%arg0: i32, %arg1: i32, %arg2: i32) -> (i32, i32) {
    %c0_i32 = arith.constant 0 : i32
    %c0_i32_0 = arith.constant 0 : i32
    %c0_i32_1 = arith.constant 0 : i32
    return %c0_i32, %c0_i32_0 : i32, i32
  }
  func.func @transform_5(%arg0: i32, %arg1: i32, %arg2: i32) -> (i32, i32, i32) {
    %c0_i32 = arith.constant 0 : i32
    %c0_i32_0 = arith.constant 0 : i32
    return %arg0, %c0_i32, %arg1 : i32, i32, i32
  }
}

</mosaic_0001>

<llo_original>
// kernel: custom-call.12
$region0: #{custom-call.12}
  %s0 = inlined_call_operand.vmem [shape: f32[2,64], index: 0, kind: output, shape index: {}]

// kernel: pointnet_sa_forward.2
$region0: #{pointnet_sa_forward.2}
  #allocation0 [shape = 'u32[]', space=smem, size = 0x4, offset = 0x4, fixed_abs, tag = 'smem constant byte address 0x4 - core index']
  #allocation1 [shape = 'u32[144,128]{1,0:T(1,128)}', space=vmem, size = 0x12000, scoped, tag = 'internal scratch']
  #allocation2 [shape = 'f32[32,128]{1,0:T(8,128)}', space=vmem, size = 0x4000, scoped, tag = 'scratch operand']
  %s0 = inlined_call_operand.vmem [shape: bf16[2,2,32,128], index: 0, kind: input, shape index: {}]
  %s1 = inlined_call_operand.vmem [shape: bf16[64,32], index: 1, kind: input, shape index: {}]
  %s2 = inlined_call_operand.vmem [shape: f32[64,1], index: 2, kind: input, shape index: {}]
  %s3 = inlined_call_operand.vmem [shape: bf16[128,64], index: 3, kind: input, shape index: {}]
  %s4 = inlined_call_operand.vmem [shape: f32[128,1], index: 4, kind: input, shape index: {}]
  %s5 = inlined_call_operand.vmem [shape: f32[2,32,128], index: 5, kind: output, shape index: {}]
  %s6 = sld [smem:[#allocation0]]
  $region61: #{pointnet_sa_forward.2} parent=0
    _
  %s8 = ssub.s32 1, %s6
  %s9 = scalar_select 0, %s8, %s6
  loop: start=0, step=1, limit=6
  $region2: #{pointnet_sa_forward.2} parent=0 // loop_pre_header
    _
  $region3: #{pointnet_sa_forward.2} parent=0 // loop_header
    %s11 = sphi 0, %s15
    %p12 = scmp.ge.s32.totalorder %s11, 6
    %s18 = sphi 0, %s37
    %s19 = sphi 0, %s33
    %s20 = sphi 0, %s29
    %s21 = sphi 0, %s18
    %s22 = sphi 0, %s19
    %s23 = sphi 0, %s20
    %s24 = sphi 0, %s21
    %s25 = sphi 0, %s22
    %s26 = sphi 0, %s23
    %s44 = sphi 0, %s46
    %s47 = sphi 0, %s44
    %s48 = sphi 0, %s47
    %s64 = sphi 0, %s48
    %s68 = sphi 0, %s68
    %s70 = sphi 0, %s68
    %s71 = sphi 0, %s70
    %s85 = sphi 0, %s71
    %s89 = sphi 0, %s89
    %s91 = sphi 0, %s89
    %s92 = sphi 0, %s91
    %s106 = sphi 0, %s92
    %s110 = sphi 0, %s110
    %s112 = sphi 0, %s110
    %s113 = sphi 0, %s112
    %s127 = sphi 0, %s113
    %s131 = sphi 0, %s131
    %s133 = sphi 0, %s131
    %s134 = sphi 0, %s133
    %s148 = sphi 0, %s134
    %s156 = sphi 0, %s158
    %s159 = sphi 0, %s156
    %s160 = sphi 0, %s159
    %s176 = sphi 0, %s160
  $region4: #{pointnet_sa_forward.2} parent=0 // loop_header_branch
    %14 = sbr.rel (%p12) target = $region8
  $region5: #{pointnet_sa_forward.2} parent=0 // loop_body
    %s16 = ssub.s32 %s11, 1
    %s17 = ssub.s32 %s11, 2
    %s27 = sadd.s32 1, %s20
    %p28 = scmp.ge.s32.totalorder %s27, 2
    %s29 = scalar_select %p28, 0, %s27
    %s30 = sadd.s32 1, %s19
    %s31 = scalar_select %p28, %s30, %s19
    %p32 = scmp.ge.s32.totalorder %s31, 1
    %s33 = scalar_select %p32, 0, %s31
    %s34 = sadd.s32 1, %s18
    %s35 = scalar_select %p32, %s34, %s18
    %p36 = scmp.ge.s32.totalorder %s35, 2
    %s37 = scalar_select %p36, 0, %s35
    %s38 = ssub.s32 %s18, %s37
    %s39 = ssub.s32 %s20, %s29
    %s40 = sor.u32 %s38, %s39
    %s41 = ssub.s32 %s19, %s33
    %s42 = sor.u32 %s40, %s41
    %p43 = scmp.eq.s32.totalorder %s42, 0
    %s45 = sadd.s32 %s44, 1
    %s46 = scalar_select %p43, %s44, %s45
    %p49 = pneg %p43
    %p50 = scmp.eq.s32.totalorder %s11, 3
    %p51 = por %p49, %p50
    %p52 = scmp.ne.s32.totalorder %s44, %s47
    %p53 = scmp.eq.s32.totalorder %s11, 0
    %p54 = por %p52, %p53
    %p55 = scmp.ne.s32.totalorder %s44, %s47
    %p56 = scmp.eq.s32.totalorder %s16, 3
    %p57 = por %p55, %p56
    %p58 = scmp.ne.s32.totalorder %s47, %s48
    %p59 = scmp.eq.s32.totalorder %s16, 0
    %p60 = por %p58, %p59
    %p61 = scmp.ne.s32.totalorder %s47, %s48
    %p62 = scmp.eq.s32.totalorder %s17, 3
    %p63 = por %p61, %p62
    %p65 = scmp.ne.s32.totalorder %s48, %s64
    %p66 = scmp.eq.s32.totalorder %s17, 0
    %p67 = por %p65, %p66
    %s69 = sadd.s32 %s68, 1
    %p72 = scmp.eq.s32.totalorder %s11, 3
    %p73 = scmp.ne.s32.totalorder %s68, %s70
    %p74 = scmp.eq.s32.totalorder %s11, 0
    %p75 = por %p73, %p74
    %p76 = scmp.ne.s32.totalorder %s68, %s70
    %p77 = scmp.eq.s32.totalorder %s16, 3
    %p78 = por %p76, %p77
    %p79 = scmp.ne.s32.totalorder %s70, %s71
    %p80 = scmp.eq.s32.totalorder %s16, 0
    %p81 = por %p79, %p80
    %p82 = scmp.ne.s32.totalorder %s70, %s71
    %p83 = scmp.eq.s32.totalorder %s17, 3
    %p84 = por %p82, %p83
    %p86 = scmp.ne.s32.totalorder %s71, %s85
    %p87 = scmp.eq.s32.totalorder %s17, 0
    %p88 = por %p86, %p87
    %s90 = sadd.s32 %s89, 1
    %p93 = scmp.eq.s32.totalorder %s11, 3
    %p94 = scmp.ne.s32.totalorder %s89, %s91
    %p95 = scmp.eq.s32.totalorder %s11, 0
    %p96 = por %p94, %p95
    %p97 = scmp.ne.s32.totalorder %s89, %s91
    %p98 = scmp.eq.s32.totalorder %s16, 3
    %p99 = por %p97, %p98
    %p100 = scmp.ne.s32.totalorder %s91, %s92
    %p101 = scmp.eq.s32.totalorder %s16, 0
    %p102 = por %p100, %p101
    %p103 = scmp.ne.s32.totalorder %s91, %s92
    %p104 = scmp.eq.s32.totalorder %s17, 3
    %p105 = por %p103, %p104
    %p107 = scmp.ne.s32.totalorder %s92, %s106
    %p108 = scmp.eq.s32.totalorder %s17, 0
    %p109 = por %p107, %p108
    %s111 = sadd.s32 %s110, 1
    %p114 = scmp.eq.s32.totalorder %s11, 3
    %p115 = scmp.ne.s32.totalorder %s110, %s112
    %p116 = scmp.eq.s32.totalorder %s11, 0
    %p117 = por %p115, %p116
    %p118 = scmp.ne.s32.totalorder %s110, %s112
    %p119 = scmp.eq.s32.totalorder %s16, 3
    %p120 = por %p118, %p119
    %p121 = scmp.ne.s32.totalorder %s112, %s113
    %p122 = scmp.eq.s32.totalorder %s16, 0
    %p123 = por %p121, %p122
    %p124 = scmp.ne.s32.totalorder %s112, %s113
    %p125 = scmp.eq.s32.totalorder %s17, 3
    %p126 = por %p124, %p125
    %p128 = scmp.ne.s32.totalorder %s113, %s127
    %p129 = scmp.eq.s32.totalorder %s17, 0
    %p130 = por %p128, %p129
    %s132 = sadd.s32 %s131, 1
    %p135 = scmp.eq.s32.totalorder %s11, 3
    %p136 = scmp.ne.s32.totalorder %s131, %s133
    %p137 = scmp.eq.s32.totalorder %s11, 0
    %p138 = por %p136, %p137
    %p139 = scmp.ne.s32.totalorder %s131, %s133
    %p140 = scmp.eq.s32.totalorder %s16, 3
    %p141 = por %p139, %p140
    %p142 = scmp.ne.s32.totalorder %s133, %s134
    %p143 = scmp.eq.s32.totalorder %s16, 0
    %p144 = por %p142, %p143
    %p145 = scmp.ne.s32.totalorder %s133, %s134
    %p146 = scmp.eq.s32.totalorder %s17, 3
    %p147 = por %p145, %p146
    %p149 = scmp.ne.s32.totalorder %s134, %s148
    %p150 = scmp.eq.s32.totalorder %s17, 0
    %p151 = por %p149, %p150
    %s152 = ssub.s32 %s18, %s37
    %s153 = ssub.s32 %s19, %s33
    %s154 = sor.u32 %s152, %s153
    %p155 = scmp.eq.s32.totalorder %s154, 0
    %s157 = sadd.s32 %s156, 1
    %s158 = scalar_select %p155, %s156, %s157
    %p161 = pneg %p155
    %p162 = scmp.eq.s32.totalorder %s11, 3
    %p163 = por %p161, %p162
    %p164 = scmp.ne.s32.totalorder %s156, %s159
    %p165 = scmp.eq.s32.totalorder %s11, 0
    %p166 = por %p164, %p165
    %p167 = scmp.ne.s32.totalorder %s156, %s159
    %p168 = scmp.eq.s32.totalorder %s16, 3
    %p169 = por %p167, %p168
    %p170 = scmp.ne.s32.totalorder %s159, %s160
    %p171 = scmp.eq.s32.totalorder %s16, 0
    %p172 = por %p170, %p171
    %p173 = scmp.ne.s32.totalorder %s159, %s160
    %p174 = scmp.eq.s32.totalorder %s17, 3
    %p175 = por %p173, %p174
    %p177 = scmp.ne.s32.totalorder %s160, %s176
    %p178 = scmp.eq.s32.totalorder %s17, 0
    %p179 = por %p177, %p178
    %p180 = scmp.le.s32.totalorder 1, %s11
    %p181 = scmp.lt.s32.totalorder %s11, 5
    %p182 = pnand %p180, %p181
    %p183 = pneg %p182
    // Predicated region
    $region9: #{pointnet_sa_forward.2} parent=5 // pred_check
      _
    $region10: #{pointnet_sa_forward.2} parent=5 // pred_check_branch
      %185 = sbr.rel (%p182) target = $region12
    $region11: #{pointnet_sa_forward.2} parent=5 // pred_region
      %s186 = ssub.s32 %s11, 1
      // Predicated region
      $region13: #{pointnet_sa_forward.2} parent=11 // pred_check
        %p187 = pneg %p81
      $region14: #{pointnet_sa_forward.2} parent=11 // pred_check_branch
        %189 = sbr.rel (%p187) target = $region16
      $region15: #{pointnet_sa_forward.2} parent=11 // pred_region
        _
      $region16: #{pointnet_sa_forward.2} parent=11 // pred_fallthru
        _
      // Predicated region
      $region17: #{pointnet_sa_forward.2} parent=11 // pred_check
        %p190 = pneg %p102
      $region18: #{pointnet_sa_forward.2} parent=11 // pred_check_branch
        %192 = sbr.rel (%p190) target = $region20
      $region19: #{pointnet_sa_forward.2} parent=11 // pred_region
        _
      $region20: #{pointnet_sa_forward.2} parent=11 // pred_fallthru
        _
      // Predicated region
      $region21: #{pointnet_sa_forward.2} parent=11 // pred_check
        %p193 = pneg %p123
      $region22: #{pointnet_sa_forward.2} parent=11 // pred_check_branch
        %195 = sbr.rel (%p193) target = $region24
      $region23: #{pointnet_sa_forward.2} parent=11 // pred_region
        _
      $region24: #{pointnet_sa_forward.2} parent=11 // pred_fallthru
        _
      // Predicated region
      $region25: #{pointnet_sa_forward.2} parent=11 // pred_check
        %p196 = pneg %p144
      $region26: #{pointnet_sa_forward.2} parent=11 // pred_check_branch
        %198 = sbr.rel (%p196) target = $region28
      $region27: #{pointnet_sa_forward.2} parent=11 // pred_region
        _
      $region28: #{pointnet_sa_forward.2} parent=11 // pred_fallthru
        _
    $region12: #{pointnet_sa_forward.2} parent=5 // pred_fallthru
      _
    %p199 = scmp.lt.s32.totalorder %s11, 4
    // Predicated region
    $region29: #{pointnet_sa_forward.2} parent=5 // pred_check
      %p200 = pneg %p199
    $region30: #{pointnet_sa_forward.2} parent=5 // pred_check_branch
      %202 = sbr.rel (%p200) target = $region32
    $region31: #{pointnet_sa_forward.2} parent=5 // pred_region
      // Predicated region
      $region33: #{pointnet_sa_forward.2} parent=31 // pred_check
        %p203 = pneg %p54
      $region34: #{pointnet_sa_forward.2} parent=31 // pred_check_branch
        %205 = sbr.rel (%p203) target = $region36
      $region35: #{pointnet_sa_forward.2} parent=31 // pred_region
        %p206 = scmp.lt.s32.totalorder %s18, 1
        %s207 = scalar_select %p206, %s18, 1
        %p208 = scmp.lt.s32.totalorder %s20, 1
        %s209 = scalar_select %p208, %s20, 1
        %p210 = scmp.lt.s32.totalorder %s19, 0
        %s211 = scalar_select %p210, %s19, 0
        %s212 = smul.addr %s209, 4
        %s213 = sadd.s32 %s211, %s212
        %s214 = smul.addr %s207, 8
        %s215 = sadd.s32 %s213, %s214
        %s216 = smul.addr %s215, 4
        %s217 = scalar_lea.vmem %s0, %s216
      $region36: #{pointnet_sa_forward.2} parent=31 // pred_fallthru
        _
    $region32: #{pointnet_sa_forward.2} parent=5 // pred_fallthru
      _
    %p218 = scmp.le.s32.totalorder 1, %s11
    %p219 = scmp.lt.s32.totalorder %s11, 5
    %p220 = pnand %p218, %p219
    %p221 = pneg %p220
    // Predicated region
    $region37: #{pointnet_sa_forward.2} parent=5 // pred_check
      _
    $region38: #{pointnet_sa_forward.2} parent=5 // pred_check_branch
      %223 = sbr.rel (%p220) target = $region40
    $region39: #{pointnet_sa_forward.2} parent=5 // pred_region
      %s224 = ssub.s32 %s11, 1
      %p225 = scmp.lt.s32.totalorder %s21, 1
      %s226 = scalar_select %p225, %s21, 1
      %p227 = scmp.lt.s32.totalorder %s23, 1
      %s228 = scalar_select %p227, %s23, 1
      %p229 = scmp.lt.s32.totalorder %s22, 0
      %s230 = scalar_select %p229, %s22, 0
      %s231 = smul.addr %s228, 4
      %s232 = sadd.s32 %s230, %s231
      %s233 = smul.addr %s226, 8
      %s234 = sadd.s32 %s232, %s233
      %s235 = smul.addr %s234, 4
      %s236 = scalar_lea.vmem %s0, %s235
      %p237 = pneg %p60
      %p238 = pneg %p57
      %p239 = pneg %p81
      %p240 = pneg %p78
      %p241 = pneg %p102
      %p242 = pneg %p99
      %p243 = pneg %p123
      %p244 = pneg %p120
      %p245 = pneg %p144
      %p246 = pneg %p141
      %p247 = pneg %p172
      %p248 = pneg %p169
      %p249 = scmp.lt.s32.totalorder %s21, 1
      %s250 = scalar_select %p249, %s21, 1
      %p251 = scmp.lt.s32.totalorder %s22, 0
      %s252 = scalar_select %p251, %s22, 0
      %s253 = smul.addr %s250, 4
      %s254 = sadd.s32 %s252, %s253
      %s255 = smul.addr %s254, 8
      %s256 = scalar_lea.vmem %s5, %s255
      %p257 = scmp.lt.s32.totalorder %s21, 1
      %s258 = scalar_select %p257, %s21, 1
      %p259 = scmp.lt.s32.totalorder %s23, 1
      %s260 = scalar_select %p259, %s23, 1
      %p261 = scmp.lt.s32.totalorder %s22, 0
      %s262 = scalar_select %p261, %s22, 0
      %s263 = smul.addr %s260, 4
      %s264 = sadd.s32 %s262, %s263
      %s265 = smul.addr %s258, 8
      %s266 = sadd.s32 %s264, %s265
      %s267 = smul.addr %s266, 4
      %s268 = scalar_lea.vmem %s0, %s267
      %p269 = scmp.lt.s32.totalorder %s21, 1
      %s270 = scalar_select %p269, %s21, 1
      %p271 = scmp.lt.s32.totalorder %s22, 0
      %s272 = scalar_select %p271, %s22, 0
      %s273 = smul.addr %s270, 4
      %s274 = sadd.s32 %s272, %s273
      %s275 = smul.addr %s274, 8
      %s276 = scalar_lea.vmem %s5, %s275
      %p278 = scmp.eq.s32.totalorder %s23, 0
      // Predicated region
      $region41: #{pointnet_sa_forward.2} parent=39 // pred_check
        %p279 = pneg %p278
      $region42: #{pointnet_sa_forward.2} parent=39 // pred_check_branch
        %281 = sbr.rel (%p279) target = $region44
      $region43: #{pointnet_sa_forward.2} parent=39 // pred_region
        %282 = vst [vmem:[#allocation2] sm:$0xff] 0.0
        %283 = vst [vmem:[#allocation2 + $0x8] sm:$0xff] 0.0
        %284 = vst [vmem:[#allocation2 + $0x10] sm:$0xff] 0.0
        %285 = vst [vmem:[#allocation2 + $0x18] sm:$0xff] 0.0
      $region44: #{pointnet_sa_forward.2} parent=39 // pred_fallthru
        _
      %v286 = vld [vmem:[%s268] sm:$0xf]
      %v287 = vld [vmem:[%s268 + $0x4] sm:$0xf]
      %v288 = vld [vmem:[%s268 + $0x8] sm:$0xf]
      %v289 = vld [vmem:[%s268 + $0xc] sm:$0xf]
      %v290 = vld [vmem:[%s1] sm:$0xf]
      %v291 = vld [vmem:[%s1 + $0x4] sm:$0xf]
      %v292 = vld [vmem:[%s1 + $0x8] sm:$0xf]
      %v293 = vld [vmem:[%s1 + $0xc] sm:$0xf]
      %v294 = vld [vmem:[%s1 + $0x10] sm:$0xf]
      %v295 = vld [vmem:[%s1 + $0x14] sm:$0xf]
      %v296 = vld [vmem:[%s1 + $0x18] sm:$0xf]
      %v297 = vld [vmem:[%s1 + $0x1c] sm:$0xf]
      %v298 = vld [vmem:[%s2] sm:$0xff]
      %v299 = vld [vmem:[%s2 + $0x8] sm:$0xff]
      %v300 = vld [vmem:[%s2 + $0x10] sm:$0xff]
      %v301 = vld [vmem:[%s2 + $0x18] sm:$0xff]
      %v302 = vld [vmem:[%s2 + $0x20] sm:$0xff]
      %v303 = vld [vmem:[%s2 + $0x28] sm:$0xff]
      %v304 = vld [vmem:[%s2 + $0x30] sm:$0xff]
      %v305 = vld [vmem:[%s2 + $0x38] sm:$0xff]
      %307 = vset.pattern.permute.xlu0 0
      %308 = vperm.xlu0 %307, %v298
      %v309 = vpop.permute.xlu0 %308
      %312 = vset.pattern.permute.xlu0 0
      %313 = vperm.xlu0 %312, %v299
      %v314 = vpop.permute.xlu0 %313
      %317 = vset.pattern.permute.xlu0 0
      %318 = vperm.xlu0 %317, %v300
      %v319 = vpop.permute.xlu0 %318
      %322 = vset.pattern.permute.xlu0 0
      %323 = vperm.xlu0 %322, %v301
      %v324 = vpop.permute.xlu0 %323
      %327 = vset.pattern.permute.xlu0 0
      %328 = vperm.xlu0 %327, %v302
      %v329 = vpop.permute.xlu0 %328
      %332 = vset.pattern.permute.xlu0 0
      %333 = vperm.xlu0 %332, %v303
      %v334 = vpop.permute.xlu0 %333
      %337 = vset.pattern.permute.xlu0 0
      %338 = vperm.xlu0 %337, %v304
      %v339 = vpop.permute.xlu0 %338
      %342 = vset.pattern.permute.xlu0 0
      %343 = vperm.xlu0 %342, %v305
      %v344 = vpop.permute.xlu0 %343
      %v354 = vunpack.c.l.b16 %v290
      %v355 = vunpack.c.l.b16 %v291
      %v356 = vunpack.c.l.b16 %v292
      %v357 = vunpack.c.l.b16 %v293
      %v358 = vunpack.c.l.b16 %v294
      %v359 = vunpack.c.l.b16 %v295
      %v360 = vunpack.c.l.b16 %v296
      %v361 = vunpack.c.l.b16 %v297
      %v362 = vpack.c.b16 %v355, %v354
      %v363 = vpack.c.b16 %v357, %v356
      %v364 = vpack.c.b16 %v359, %v358
      %v365 = vpack.c.b16 %v361, %v360
      %v370 = vunpack.c.l.b16 %v286
      %v371 = vunpack.c.l.b16 %v287
      %v372 = vunpack.c.l.b16 %v288
      %v373 = vunpack.c.l.b16 %v289
      %v374 = vpack.c.b16 %v371, %v370
      %v375 = vpack.c.b16 %v373, %v372
      %vm378 = vcmask 261120
      %v380 = vsel %vm378, %v362, 0
      %v383 = vsel %vm378, %v363, 0
      %v386 = vsel %vm378, %v364, 0
      %v389 = vsel %vm378, %v365, 0
      %391 = vmatprep.subr.bf16.mxu0 0
      %392 = vmatpush1.bf16.msra.mxu0 %v374
      %393 = vmatprep.subr.bf16.mxu0 0
      %394 = vmatpush1.bf16.msra.mxu0 %v375
      %395 = vmatprep.subr.bf16.mxu0 0
      %396 = vmatpush1.bf16.msra.mxu0 0
      %397 = vmatprep.subr.bf16.mxu0 0
      %398 = vmatpush1.bf16.msra.mxu0 0
      %399 = vmatprep.subr.bf16.mxu0 0
      %400 = vmatpush1.bf16.msra.mxu0 0
      %401 = vmatprep.subr.bf16.mxu0 0
      %402 = vmatpush1.bf16.msra.mxu0 0
      %403 = vmatprep.subr.bf16.mxu0 0
      %404 = vmatpush1.bf16.msra.mxu0 0
      %405 = vmatprep.subr.bf16.mxu0 0
      %406 = vmatpush1.bf16.msra.mxu0 0
      %407 = vmatprep.subr.bf16.mxu0 0
      %408 = vmatpush1.bf16.msra.mxu0 0
      %409 = vmatprep.subr.bf16.mxu0 0
      %410 = vmatpush1.bf16.msra.mxu0 0
      %411 = vmatprep.subr.bf16.mxu0 0
      %412 = vmatpush1.bf16.msra.mxu0 0
      %413 = vmatprep.subr.bf16.mxu0 0
      %414 = vmatpush1.bf16.msra.mxu0 0
      %415 = vmatprep.subr.bf16.mxu0 0
      %416 = vmatpush1.bf16.msra.mxu0 0
      %417 = vmatprep.subr.bf16.mxu0 0
      %418 = vmatpush1.bf16.msra.mxu0 0
      %419 = vmatprep.subr.bf16.mxu0 0
      %420 = vmatpush1.bf16.msra.mxu0 0
      %421 = vmatprep.subr.bf16.mxu0 0
      %422 = vmatpush1.bf16.msra.mxu0 0
      %423 = vmatprep.mubr.bf16.mxu0 0
      %424 = vmatmul.mubr.bf16.gmra.mrb[0].mxu0 %v380
      %v425 = vpop.f32.mrb[0].mxu0
      %v426 = vadd.f32 %v309, %v425
      %v427 = vpop.f32.mrb[0].mxu0
      %v428 = vpop.f32.mrb[0].mxu0
      %v429 = vadd.f32 %v314, %v428
      %v430 = vpop.f32.mrb[0].mxu0
      %431 = vmatprep.mubr.bf16.mxu0 0
      %432 = vmatmul.mubr.bf16.gmra.mrb[0].mxu0 %v383
      %v433 = vpop.f32.mrb[0].mxu0
      %v434 = vadd.f32 %v319, %v433
      %v435 = vpop.f32.mrb[0].mxu0
      %v436 = vpop.f32.mrb[0].mxu0
      %v437 = vadd.f32 %v324, %v436
      %v438 = vpop.f32.mrb[0].mxu0
      %439 = vmatprep.mubr.bf16.mxu0 0
      %440 = vmatmul.mubr.bf16.gmra.mrb[0].mxu0 %v386
      %v441 = vpop.f32.mrb[0].mxu0
      %v442 = vadd.f32 %v329, %v441
      %v443 = vpop.f32.mrb[0].mxu0
      %v444 = vpop.f32.mrb[0].mxu0
      %v445 = vadd.f32 %v334, %v444
      %v446 = vpop.f32.mrb[0].mxu0
      %447 = vmatprep.mubr.bf16.mxu0 0
      %448 = vmatmul.mubr.bf16.gmra.mrb[0].mxu0 %v389
      %v449 = vpop.f32.mrb[0].mxu0
      %v450 = vadd.f32 %v339, %v449
      %v451 = vpop.f32.mrb[0].mxu0
      %v452 = vpop.f32.mrb[0].mxu0
      %v453 = vadd.f32 %v344, %v452
      %v454 = vpop.f32.mrb[0].mxu0
      %455 = vdwg.mxu0
      %v456 = vmax.f32 %v426, 0.0
      %v457 = vmax.f32 %v429, 0.0
      %v458 = vmax.f32 %v434, 0.0
      %v459 = vmax.f32 %v437, 0.0
      %v460 = vmax.f32 %v442, 0.0
      %v461 = vmax.f32 %v445, 0.0
      %v462 = vmax.f32 %v450, 0.0
      %v463 = vmax.f32 %v453, 0.0
      %v464 = vpack.c.bf16 %v457, %v456
      %v465 = vpack.c.bf16 %v459, %v458
      %v466 = vpack.c.bf16 %v461, %v460
      %v467 = vpack.c.bf16 %v463, %v462
      %v468 = vld [vmem:[%s3] sm:$0xf]
      %v469 = vld [vmem:[%s3 + $0x4] sm:$0xf]
      %v470 = vld [vmem:[%s3 + $0x8] sm:$0xf]
      %v471 = vld [vmem:[%s3 + $0xc] sm:$0xf]
      %v472 = vld [vmem:[%s3 + $0x10] sm:$0xf]
      %v473 = vld [vmem:[%s3 + $0x14] sm:$0xf]
      %v474 = vld [vmem:[%s3 + $0x18] sm:$0xf]
      %v475 = vld [vmem:[%s3 + $0x1c] sm:$0xf]
      %v476 = vld [vmem:[%s3 + $0x20] sm:$0xf]
      %v477 = vld [vmem:[%s3 + $0x24] sm:$0xf]
      %v478 = vld [vmem:[%s3 + $0x28] sm:$0xf]
      %v479 = vld [vmem:[%s3 + $0x2c] sm:$0xf]
      %v480 = vld [vmem:[%s3 + $0x30] sm:$0xf]
      %v481 = vld [vmem:[%s3 + $0x34] sm:$0xf]
      %v482 = vld [vmem:[%s3 + $0x38] sm:$0xf]
      %v483 = vld [vmem:[%s3 + $0x3c] sm:$0xf]
      %v484 = vld [vmem:[%s4] sm:$0xff]
      %v485 = vld [vmem:[%s4 + $0x8] sm:$0xff]
      %v486 = vld [vmem:[%s4 + $0x10] sm:$0xff]
      %v487 = vld [vmem:[%s4 + $0x18] sm:$0xff]
      %v488 = vld [vmem:[%s4 + $0x20] sm:$0xff]
      %v489 = vld [vmem:[%s4 + $0x28] sm:$0xff]
      %v490 = vld [vmem:[%s4 + $0x30] sm:$0xff]
      %v491 = vld [vmem:[%s4 + $0x38] sm:$0xff]
      %v492 = vld [vmem:[%s4 + $0x40] sm:$0xff]
      %v493 = vld [vmem:[%s4 + $0x48] sm:$0xff]
      %v494 = vld [vmem:[%s4 + $0x50] sm:$0xff]
      %v495 = vld [vmem:[%s4 + $0x58] sm:$0xff]
      %v496 = vld [vmem:[%s4 + $0x60] sm:$0xff]
      %v497 = vld [vmem:[%s4 + $0x68] sm:$0xff]
      %v498 = vld [vmem:[%s4 + $0x70] sm:$0xff]
      %v499 = vld [vmem:[%s4 + $0x78] sm:$0xff]
      %501 = vset.pattern.permute.xlu0 0
      %502 = vperm.xlu0 %501, %v484
      %v503 = vpop.permute.xlu0 %502
      %506 = vset.pattern.permute.xlu0 0
      %507 = vperm.xlu0 %506, %v485
      %v508 = vpop.permute.xlu0 %507
      %511 = vset.pattern.permute.xlu0 0
      %512 = vperm.xlu0 %511, %v486
      %v513 = vpop.permute.xlu0 %512
      %516 = vset.pattern.permute.xlu0 0
      %517 = vperm.xlu0 %516, %v487
      %v518 = vpop.permute.xlu0 %517
      %521 = vset.pattern.permute.xlu0 0
      %522 = vperm.xlu0 %521, %v488
      %v523 = vpop.permute.xlu0 %522
      %526 = vset.pattern.permute.xlu0 0
      %527 = vperm.xlu0 %526, %v489
      %v528 = vpop.permute.xlu0 %527
      %531 = vset.pattern.permute.xlu0 0
      %532 = vperm.xlu0 %531, %v490
      %v533 = vpop.permute.xlu0 %532
      %536 = vset.pattern.permute.xlu0 0
      %537 = vperm.xlu0 %536, %v491
      %v538 = vpop.permute.xlu0 %537
      %541 = vset.pattern.permute.xlu0 0
      %542 = vperm.xlu0 %541, %v492
      %v543 = vpop.permute.xlu0 %542
      %546 = vset.pattern.permute.xlu0 0
      %547 = vperm.xlu0 %546, %v493
      %v548 = vpop.permute.xlu0 %547
      %551 = vset.pattern.permute.xlu0 0
      %552 = vperm.xlu0 %551, %v494
      %v553 = vpop.permute.xlu0 %552
      %556 = vset.pattern.permute.xlu0 0
      %557 = vperm.xlu0 %556, %v495
      %v558 = vpop.permute.xlu0 %557
      %561 = vset.pattern.permute.xlu0 0
      %562 = vperm.xlu0 %561, %v496
      %v563 = vpop.permute.xlu0 %562
      %566 = vset.pattern.permute.xlu0 0
      %567 = vperm.xlu0 %566, %v497
      %v568 = vpop.permute.xlu0 %567
      %571 = vset.pattern.permute.xlu0 0
      %572 = vperm.xlu0 %571, %v498
      %v573 = vpop.permute.xlu0 %572
      %576 = vset.pattern.permute.xlu0 0
      %577 = vperm.xlu0 %576, %v499
      %v578 = vpop.permute.xlu0 %577
      %v596 = vunpack.c.l.b16 %v468
      %v597 = vunpack.c.l.b16 %v469
      %v598 = vunpack.c.l.b16 %v470
      %v599 = vunpack.c.l.b16 %v471
      %v600 = vunpack.c.l.b16 %v472
      %v601 = vunpack.c.l.b16 %v473
      %v602 = vunpack.c.l.b16 %v474
      %v603 = vunpack.c.l.b16 %v475
      %v604 = vunpack.c.l.b16 %v476
      %v605 = vunpack.c.l.b16 %v477
      %v606 = vunpack.c.l.b16 %v478
      %v607 = vunpack.c.l.b16 %v479
      %v608 = vunpack.c.l.b16 %v480
      %v609 = vunpack.c.l.b16 %v481
      %v610 = vunpack.c.l.b16 %v482
      %v611 = vunpack.c.l.b16 %v483
      %v612 = vpack.c.b16 %v597, %v596
      %v613 = vpack.c.b16 %v599, %v598
      %v614 = vpack.c.b16 %v601, %v600
      %v615 = vpack.c.b16 %v603, %v602
      %v616 = vpack.c.b16 %v605, %v604
      %v617 = vpack.c.b16 %v607, %v606
      %v618 = vpack.c.b16 %v609, %v608
      %v619 = vpack.c.b16 %v611, %v610
      %vm620 = vcmask 523264
      %v622 = vsel %vm620, %v612, 0
      %v625 = vsel %vm620, %v613, 0
      %v628 = vsel %vm620, %v614, 0
      %v631 = vsel %vm620, %v615, 0
      %v634 = vsel %vm620, %v616, 0
      %v637 = vsel %vm620, %v617, 0
      %v640 = vsel %vm620, %v618, 0
      %v643 = vsel %vm620, %v619, 0
      %645 = vmatprep.subr.bf16.mxu0 0
      %646 = vmatpush1.bf16.msra.mxu0 %v464
      %647 = vmatprep.subr.bf16.mxu0 0
      %648 = vmatpush1.bf16.msra.mxu0 %v465
      %649 = vmatprep.subr.bf16.mxu0 0
      %650 = vmatpush1.bf16.msra.mxu0 %v466
      %651 = vmatprep.subr.bf16.mxu0 0
      %652 = vmatpush1.bf16.msra.mxu0 %v467
      %653 = vmatprep.subr.bf16.mxu0 0
      %654 = vmatpush1.bf16.msra.mxu0 0
      %655 = vmatprep.subr.bf16.mxu0 0
      %656 = vmatpush1.bf16.msra.mxu0 0
      %657 = vmatprep.subr.bf16.mxu0 0
      %658 = vmatpush1.bf16.msra.mxu0 0
      %659 = vmatprep.subr.bf16.mxu0 0
      %660 = vmatpush1.bf16.msra.mxu0 0
      %661 = vmatprep.subr.bf16.mxu0 0
      %662 = vmatpush1.bf16.msra.mxu0 0
      %663 = vmatprep.subr.bf16.mxu0 0
      %664 = vmatpush1.bf16.msra.mxu0 0
      %665 = vmatprep.subr.bf16.mxu0 0
      %666 = vmatpush1.bf16.msra.mxu0 0
      %667 = vmatprep.subr.bf16.mxu0 0
      %668 = vmatpush1.bf16.msra.mxu0 0
      %669 = vmatprep.subr.bf16.mxu0 0
      %670 = vmatpush1.bf16.msra.mxu0 0
      %671 = vmatprep.subr.bf16.mxu0 0
      %672 = vmatpush1.bf16.msra.mxu0 0
      %673 = vmatprep.subr.bf16.mxu0 0
      %674 = vmatpush1.bf16.msra.mxu0 0
      %675 = vmatprep.subr.bf16.mxu0 0
      %676 = vmatpush1.bf16.msra.mxu0 0
      %677 = vmatprep.mubr.bf16.mxu0 0
      %678 = vmatmul.mubr.bf16.gmra.mrb[0].mxu0 %v622
      %v679 = vpop.f32.mrb[0].mxu0
      %v680 = vadd.f32 %v503, %v679
      %v681 = vpop.f32.mrb[0].mxu0
      %v682 = vpop.f32.mrb[0].mxu0
      %v683 = vadd.f32 %v508, %v682
      %v684 = vpop.f32.mrb[0].mxu0
      %685 = vmatprep.mubr.bf16.mxu0 0
      %686 = vmatmul.mubr.bf16.gmra.mrb[0].mxu0 %v625
      %v687 = vpop.f32.mrb[0].mxu0
      %v688 = vadd.f32 %v513, %v687
      %v689 = vpop.f32.mrb[0].mxu0
      %v690 = vpop.f32.mrb[0].mxu0
      %v691 = vadd.f32 %v518, %v690
      %v692 = vpop.f32.mrb[0].mxu0
      %693 = vmatprep.mubr.bf16.mxu0 0
      %694 = vmatmul.mubr.bf16.gmra.mrb[0].mxu0 %v628
      %v695 = vpop.f32.mrb[0].mxu0
      %v696 = vadd.f32 %v523, %v695
      %v697 = vpop.f32.mrb[0].mxu0
      %v698 = vpop.f32.mrb[0].mxu0
      %v699 = vadd.f32 %v528, %v698
      %v700 = vpop.f32.mrb[0].mxu0
      %701 = vmatprep.mubr.bf16.mxu0 0
      %702 = vmatmul.mubr.bf16.gmra.mrb[0].mxu0 %v631
      %v703 = vpop.f32.mrb[0].mxu0
      %v704 = vadd.f32 %v533, %v703
      %v705 = vpop.f32.mrb[0].mxu0
      %v706 = vpop.f32.mrb[0].mxu0
      %v707 = vadd.f32 %v538, %v706
      %v708 = vpop.f32.mrb[0].mxu0
      %709 = vmatprep.mubr.bf16.mxu0 0
      %710 = vmatmul.mubr.bf16.gmra.mrb[0].mxu0 %v634
      %v711 = vpop.f32.mrb[0].mxu0
      %v712 = vadd.f32 %v543, %v711
      %v713 = vpop.f32.mrb[0].mxu0
      %v714 = vpop.f32.mrb[0].mxu0
      %v715 = vadd.f32 %v548, %v714
      %v716 = vpop.f32.mrb[0].mxu0
      %717 = vmatprep.mubr.bf16.mxu0 0
      %718 = vmatmul.mubr.bf16.gmra.mrb[0].mxu0 %v637
      %v719 = vpop.f32.mrb[0].mxu0
      %v720 = vadd.f32 %v553, %v719
      %v721 = vpop.f32.mrb[0].mxu0
      %v722 = vpop.f32.mrb[0].mxu0
      %v723 = vadd.f32 %v558, %v722
      %v724 = vpop.f32.mrb[0].mxu0
      %725 = vmatprep.mubr.bf16.mxu0 0
      %726 = vmatmul.mubr.bf16.gmra.mrb[0].mxu0 %v640
      %v727 = vpop.f32.mrb[0].mxu0
      %v728 = vadd.f32 %v563, %v727
      %v729 = vpop.f32.mrb[0].mxu0
      %v730 = vpop.f32.mrb[0].mxu0
      %v731 = vadd.f32 %v568, %v730
      %v732 = vpop.f32.mrb[0].mxu0
      %733 = vmatprep.mubr.bf16.mxu0 0
      %734 = vmatmul.mubr.bf16.gmra.mrb[0].mxu0 %v643
      %v735 = vpop.f32.mrb[0].mxu0
      %v736 = vadd.f32 %v573, %v735
      %v737 = vpop.f32.mrb[0].mxu0
      %v738 = vpop.f32.mrb[0].mxu0
      %v739 = vadd.f32 %v578, %v738
      %v740 = vpop.f32.mrb[0].mxu0
      %741 = vdwg.mxu0
      %v742 = vmax.f32 %v680, 0.0
      %v743 = vmax.f32 %v683, 0.0
      %v744 = vmax.f32 %v688, 0.0
      %v745 = vmax.f32 %v691, 0.0
      %v746 = vmax.f32 %v696, 0.0
      %v747 = vmax.f32 %v699, 0.0
      %v748 = vmax.f32 %v704, 0.0
      %v749 = vmax.f32 %v707, 0.0
      %v750 = vmax.f32 %v712, 0.0
      %v751 = vmax.f32 %v715, 0.0
      %v752 = vmax.f32 %v720, 0.0
      %v753 = vmax.f32 %v723, 0.0
      %v754 = vmax.f32 %v728, 0.0
      %v755 = vmax.f32 %v731, 0.0
      %v756 = vmax.f32 %v736, 0.0
      %v757 = vmax.f32 %v739, 0.0
      %v758 = vmax.f32 %v742, %v746
      %v759 = vmax.f32 %v743, %v747
      %v760 = vmax.f32 %v744, %v748
      %v761 = vmax.f32 %v745, %v749
      %v762 = vmax.f32 %v758, %v750
      %v763 = vmax.f32 %v759, %v751
      %v764 = vmax.f32 %v760, %v752
      %v765 = vmax.f32 %v761, %v753
      %v766 = vmax.f32 %v762, %v754
      %v767 = vmax.f32 %v763, %v755
      %v768 = vmax.f32 %v764, %v756
      %v769 = vmax.f32 %v765, %v757
      %v770 = vld [vmem:[#allocation2] sm:$0xff]
      %v771 = vld [vmem:[#allocation2 + $0x8] sm:$0xff]
      %v772 = vld [vmem:[#allocation2 + $0x10] sm:$0xff]
      %v773 = vld [vmem:[#allocation2 + $0x18] sm:$0xff]
      %v774 = vmax.f32 %v770, %v766
      %v775 = vmax.f32 %v771, %v767
      %v776 = vmax.f32 %v772, %v768
      %v777 = vmax.f32 %v773, %v769
      %778 = vst [vmem:[#allocation2] sm:$0xff] %v774
      %779 = vst [vmem:[#allocation2 + $0x8] sm:$0xff] %v775
      %780 = vst [vmem:[#allocation2 + $0x10] sm:$0xff] %v776
      %781 = vst [vmem:[#allocation2 + $0x18] sm:$0xff] %v777
      %p782 = scmp.eq.s32.totalorder %s23, 1
      // Predicated region
      $region45: #{pointnet_sa_forward.2} parent=39 // pred_check
        %p783 = pneg %p782
      $region46: #{pointnet_sa_forward.2} parent=39 // pred_check_branch
        %785 = sbr.rel (%p783) target = $region48
      $region47: #{pointnet_sa_forward.2} parent=39 // pred_region
        %v786 = vld [vmem:[#allocation2] sm:$0xff]
        %v787 = vld [vmem:[#allocation2 + $0x8] sm:$0xff]
        %v788 = vld [vmem:[#allocation2 + $0x10] sm:$0xff]
        %v789 = vld [vmem:[#allocation2 + $0x18] sm:$0xff]
        %790 = vst [vmem:[%s276] sm:$0xff] %v786
        %791 = vst [vmem:[%s276 + $0x8] sm:$0xff] %v787
        %792 = vst [vmem:[%s276 + $0x10] sm:$0xff] %v788
        %793 = vst [vmem:[%s276 + $0x18] sm:$0xff] %v789
      $region48: #{pointnet_sa_forward.2} parent=39 // pred_fallthru
        _
      %p794 = scmp.lt.s32.totalorder %s21, 1
      %s795 = scalar_select %p794, %s21, 1
      %p796 = scmp.lt.s32.totalorder %s22, 0
      %s797 = scalar_select %p796, %s22, 0
      %s798 = smul.addr %s795, 4
      %s799 = sadd.s32 %s797, %s798
      %s800 = smul.addr %s799, 8
      %s801 = scalar_lea.vmem %s5, %s800
      // Predicated region
      $region49: #{pointnet_sa_forward.2} parent=39 // pred_check
        %p802 = pneg %p169
      $region50: #{pointnet_sa_forward.2} parent=39 // pred_check_branch
        %804 = sbr.rel (%p802) target = $region52
      $region51: #{pointnet_sa_forward.2} parent=39 // pred_region
        _
      $region52: #{pointnet_sa_forward.2} parent=39 // pred_fallthru
        _
    $region40: #{pointnet_sa_forward.2} parent=5 // pred_fallthru
      _
    %p805 = scmp.le.s32.totalorder 2, %s11
    // Predicated region
    $region53: #{pointnet_sa_forward.2} parent=5 // pred_check
      %p806 = pneg %p805
    $region54: #{pointnet_sa_forward.2} parent=5 // pred_check_branch
      %808 = sbr.rel (%p806) target = $region56
    $region55: #{pointnet_sa_forward.2} parent=5 // pred_region
      %s809 = ssub.s32 %s11, 2
      // Predicated region
      $region57: #{pointnet_sa_forward.2} parent=55 // pred_check
        %p810 = pneg %p175
      $region58: #{pointnet_sa_forward.2} parent=55 // pred_check_branch
        %812 = sbr.rel (%p810) target = $region60
      $region59: #{pointnet_sa_forward.2} parent=55 // pred_region
        %p813 = scmp.lt.s32.totalorder %s24, 1
        %s814 = scalar_select %p813, %s24, 1
        %p815 = scmp.lt.s32.totalorder %s25, 0
        %s816 = scalar_select %p815, %s25, 0
        %s817 = smul.addr %s814, 4
        %s818 = sadd.s32 %s816, %s817
        %s819 = smul.addr %s818, 8
        %s820 = scalar_lea.vmem %s5, %s819
      $region60: #{pointnet_sa_forward.2} parent=55 // pred_fallthru
        _
    $region56: #{pointnet_sa_forward.2} parent=5 // pred_fallthru
      _
  $region6: #{pointnet_sa_forward.2} parent=0 // loop_footer
    %s15 = sadd.s32 1, %s11
  $region7: #{pointnet_sa_forward.2} parent=0 // loop_footer_branch
    %10 = sbr.rel target = $region3
  $region8: #{pointnet_sa_forward.2} parent=0 // loop_exit
    _

// kernel: pointnet_sa_forward.3
$region0: #{pointnet_sa_forward.3}
  #allocation0 [shape = 'u32[]', space=smem, size = 0x4, offset = 0x4, fixed_abs, tag = 'smem constant byte address 0x4 - core index']
  #allocation1 [shape = 'u32[144,128]{1,0:T(1,128)}', space=vmem, size = 0x12000, scoped, tag = 'internal scratch']
  #allocation2 [shape = 'f32[32,128]{1,0:T(8,128)}', space=vmem, size = 0x4000, scoped, tag = 'scratch operand']
  %s0 = inlined_call_operand.vmem [shape: bf16[2,4,32,128], index: 0, kind: input, shape index: {}]
  %s1 = inlined_call_operand.vmem [shape: bf16[64,32], index: 1, kind: input, shape index: {}]
  %s2 = inlined_call_operand.vmem [shape: f32[64,1], index: 2, kind: input, shape index: {}]
  %s3 = inlined_call_operand.vmem [shape: bf16[128,64], index: 3, kind: input, shape index: {}]
  %s4 = inlined_call_operand.vmem [shape: f32[128,1], index: 4, kind: input, shape index: {}]
  %s5 = inlined_call_operand.vmem [shape: f32[2,32,128], index: 5, kind: output, shape index: {}]
  %s6 = sld [smem:[#allocation0]]
  $region61: #{pointnet_sa_forward.3} parent=0
    _
  %s8 = ssub.s32 1, %s6
  %s9 = scalar_select 0, %s8, %s6
  loop: start=0, step=1, limit=10
  $region2: #{pointnet_sa_forward.3} parent=0 // loop_pre_header
    _
  $region3: #{pointnet_sa_forward.3} parent=0 // loop_header
    %s11 = sphi 0, %s15
    %p12 = scmp.ge.s32.totalorder %s11, 10
    %s18 = sphi 0, %s37
    %s19 = sphi 0, %s33
    %s20 = sphi 0, %s29
    %s21 = sphi 0, %s18
    %s22 = sphi 0, %s19
    %s23 = sphi 0, %s20
    %s24 = sphi 0, %s21
    %s25 = sphi 0, %s22
    %s26 = sphi 0, %s23
    %s44 = sphi 0, %s46
    %s47 = sphi 0, %s44
    %s48 = sphi 0, %s47
    %s64 = sphi 0, %s48
    %s68 = sphi 0, %s68
    %s70 = sphi 0, %s68
    %s71 = sphi 0, %s70
    %s85 = sphi 0, %s71
    %s89 = sphi 0, %s89
    %s91 = sphi 0, %s89
    %s92 = sphi 0, %s91
    %s106 = sphi 0, %s92
    %s110 = sphi 0, %s110
    %s112 = sphi 0, %s110
    %s113 = sphi 0, %s112
    %s127 = sphi 0, %s113
    %s131 = sphi 0, %s131
    %s133 = sphi 0, %s131
    %s134 = sphi 0, %s133
    %s148 = sphi 0, %s134
    %s156 = sphi 0, %s158
    %s159 = sphi 0, %s156
    %s160 = sphi 0, %s159
    %s176 = sphi 0, %s160
  $region4: #{pointnet_sa_forward.3} parent=0 // loop_header_branch
    %14 = sbr.rel (%p12) target = $region8
  $region5: #{pointnet_sa_forward.3} parent=0 // loop_body
    %s16 = ssub.s32 %s11, 1
    %s17 = ssub.s32 %s11, 2
    %s27 = sadd.s32 1, %s20
    %p28 = scmp.ge.s32.totalorder %s27, 4
    %s29 = scalar_select %p28, 0, %s27
    %s30 = sadd.s32 1, %s19
    %s31 = scalar_select %p28, %s30, %s19
    %p32 = scmp.ge.s32.totalorder %s31, 1
    %s33 = scalar_select %p32, 0, %s31
    %s34 = sadd.s32 1, %s18
    %s35 = scalar_select %p32, %s34, %s18
    %p36 = scmp.ge.s32.totalorder %s35, 2
    %s37 = scalar_select %p36, 0, %s35
    %s38 = ssub.s32 %s18, %s37
    %s39 = ssub.s32 %s20, %s29
    %s40 = sor.u32 %s38, %s39
    %s41 = ssub.s32 %s19, %s33
    %s42 = sor.u32 %s40, %s41
    %p43 = scmp.eq.s32.totalorder %s42, 0
    %s45 = sadd.s32 %s44, 1
    %s46 = scalar_select %p43, %s44, %s45
    %p49 = pneg %p43
    %p50 = scmp.eq.s32.totalorder %s11, 7
    %p51 = por %p49, %p50
    %p52 = scmp.ne.s32.totalorder %s44, %s47
    %p53 = scmp.eq.s32.totalorder %s11, 0
    %p54 = por %p52, %p53
    %p55 = scmp.ne.s32.totalorder %s44, %s47
    %p56 = scmp.eq.s32.totalorder %s16, 7
    %p57 = por %p55, %p56
    %p58 = scmp.ne.s32.totalorder %s47, %s48
    %p59 = scmp.eq.s32.totalorder %s16, 0
    %p60 = por %p58, %p59
    %p61 = scmp.ne.s32.totalorder %s47, %s48
    %p62 = scmp.eq.s32.totalorder %s17, 7
    %p63 = por %p61, %p62
    %p65 = scmp.ne.s32.totalorder %s48, %s64
    %p66 = scmp.eq.s32.totalorder %s17, 0
    %p67 = por %p65, %p66
    %s69 = sadd.s32 %s68, 1
    %p72 = scmp.eq.s32.totalorder %s11, 7
    %p73 = scmp.ne.s32.totalorder %s68, %s70
    %p74 = scmp.eq.s32.totalorder %s11, 0
    %p75 = por %p73, %p74
    %p76 = scmp.ne.s32.totalorder %s68, %s70
    %p77 = scmp.eq.s32.totalorder %s16, 7
    %p78 = por %p76, %p77
    %p79 = scmp.ne.s32.totalorder %s70, %s71
    %p80 = scmp.eq.s32.totalorder %s16, 0
    %p81 = por %p79, %p80
    %p82 = scmp.ne.s32.totalorder %s70, %s71
    %p83 = scmp.eq.s32.totalorder %s17, 7
    %p84 = por %p82, %p83
    %p86 = scmp.ne.s32.totalorder %s71, %s85
    %p87 = scmp.eq.s32.totalorder %s17, 0
    %p88 = por %p86, %p87
    %s90 = sadd.s32 %s89, 1
    %p93 = scmp.eq.s32.totalorder %s11, 7
    %p94 = scmp.ne.s32.totalorder %s89, %s91
    %p95 = scmp.eq.s32.totalorder %s11, 0
    %p96 = por %p94, %p95
    %p97 = scmp.ne.s32.totalorder %s89, %s91
    %p98 = scmp.eq.s32.totalorder %s16, 7
    %p99 = por %p97, %p98
    %p100 = scmp.ne.s32.totalorder %s91, %s92
    %p101 = scmp.eq.s32.totalorder %s16, 0
    %p102 = por %p100, %p101
    %p103 = scmp.ne.s32.totalorder %s91, %s92
    %p104 = scmp.eq.s32.totalorder %s17, 7
    %p105 = por %p103, %p104
    %p107 = scmp.ne.s32.totalorder %s92, %s106
    %p108 = scmp.eq.s32.totalorder %s17, 0
    %p109 = por %p107, %p108
    %s111 = sadd.s32 %s110, 1
    %p114 = scmp.eq.s32.totalorder %s11, 7
    %p115 = scmp.ne.s32.totalorder %s110, %s112
    %p116 = scmp.eq.s32.totalorder %s11, 0
    %p117 = por %p115, %p116
    %p118 = scmp.ne.s32.totalorder %s110, %s112
    %p119 = scmp.eq.s32.totalorder %s16, 7
    %p120 = por %p118, %p119
    %p121 = scmp.ne.s32.totalorder %s112, %s113
    %p122 = scmp.eq.s32.totalorder %s16, 0
    %p123 = por %p121, %p122
    %p124 = scmp.ne.s32.totalorder %s112, %s113
    %p125 = scmp.eq.s32.totalorder %s17, 7
    %p126 = por %p124, %p125
    %p128 = scmp.ne.s32.totalorder %s113, %s127
    %p129 = scmp.eq.s32.totalorder %s17, 0
    %p130 = por %p128, %p129
    %s132 = sadd.s32 %s131, 1
    %p135 = scmp.eq.s32.totalorder %s11, 7
    %p136 = scmp.ne.s32.totalorder %s131, %s133
    %p137 = scmp.eq.s32.totalorder %s11, 0
    %p138 = por %p136, %p137
    %p139 = scmp.ne.s32.totalorder %s131, %s133
    %p140 = scmp.eq.s32.totalorder %s16, 7
    %p141 = por %p139, %p140
    %p142 = scmp.ne.s32.totalorder %s133, %s134
    %p143 = scmp.eq.s32.totalorder %s16, 0
    %p144 = por %p142, %p143
    %p145 = scmp.ne.s32.totalorder %s133, %s134
    %p146 = scmp.eq.s32.totalorder %s17, 7
    %p147 = por %p145, %p146
    %p149 = scmp.ne.s32.totalorder %s134, %s148
    %p150 = scmp.eq.s32.totalorder %s17, 0
    %p151 = por %p149, %p150
    %s152 = ssub.s32 %s18, %s37
    %s153 = ssub.s32 %s19, %s33
    %s154 = sor.u32 %s152, %s153
    %p155 = scmp.eq.s32.totalorder %s154, 0
    %s157 = sadd.s32 %s156, 1
    %s158 = scalar_select %p155, %s156, %s157
    %p161 = pneg %p155
    %p162 = scmp.eq.s32.totalorder %s11, 7
    %p163 = por %p161, %p162
    %p164 = scmp.ne.s32.totalorder %s156, %s159
    %p165 = scmp.eq.s32.totalorder %s11, 0
    %p166 = por %p164, %p165
    %p167 = scmp.ne.s32.totalorder %s156, %s159
    %p168 = scmp.eq.s32.totalorder %s16, 7
    %p169 = por %p167, %p168
    %p170 = scmp.ne.s32.totalorder %s159, %s160
    %p171 = scmp.eq.s32.totalorder %s16, 0
    %p172 = por %p170, %p171
    %p173 = scmp.ne.s32.totalorder %s159, %s160
    %p174 = scmp.eq.s32.totalorder %s17, 7
    %p175 = por %p173, %p174
    %p177 = scmp.ne.s32.totalorder %s160, %s176
    %p178 = scmp.eq.s32.totalorder %s17, 0
    %p179 = por %p177, %p178
    %p180 = scmp.le.s32.totalorder 1, %s11
    %p181 = scmp.lt.s32.totalorder %s11, 9
    %p182 = pnand %p180, %p181
    %p183 = pneg %p182
    // Predicated region
    $region9: #{pointnet_sa_forward.3} parent=5 // pred_check
      _
    $region10: #{pointnet_sa_forward.3} parent=5 // pred_check_branch
      %185 = sbr.rel (%p182) target = $region12
    $region11: #{pointnet_sa_forward.3} parent=5 // pred_region
      %s186 = ssub.s32 %s11, 1
      // Predicated region
      $region13: #{pointnet_sa_forward.3} parent=11 // pred_check
        %p187 = pneg %p81
      $region14: #{pointnet_sa_forward.3} parent=11 // pred_check_branch
        %189 = sbr.rel (%p187) target = $region16
      $region15: #{pointnet_sa_forward.3} parent=11 // pred_region
        _
      $region16: #{pointnet_sa_forward.3} parent=11 // pred_fallthru
        _
      // Predicated region
      $region17: #{pointnet_sa_forward.3} parent=11 // pred_check
        %p190 = pneg %p102
      $region18: #{pointnet_sa_forward.3} parent=11 // pred_check_branch
        %192 = sbr.rel (%p190) target = $region20
      $region19: #{pointnet_sa_forward.3} parent=11 // pred_region
        _
      $region20: #{pointnet_sa_forward.3} parent=11 // pred_fallthru
        _
      // Predicated region
      $region21: #{pointnet_sa_forward.3} parent=11 // pred_check
        %p193 = pneg %p123
      $region22: #{pointnet_sa_forward.3} parent=11 // pred_check_branch
        %195 = sbr.rel (%p193) target = $region24
      $region23: #{pointnet_sa_forward.3} parent=11 // pred_region
        _
      $region24: #{pointnet_sa_forward.3} parent=11 // pred_fallthru
        _
      // Predicated region
      $region25: #{pointnet_sa_forward.3} parent=11 // pred_check
        %p196 = pneg %p144
      $region26: #{pointnet_sa_forward.3} parent=11 // pred_check_branch
        %198 = sbr.rel (%p196) target = $region28
      $region27: #{pointnet_sa_forward.3} parent=11 // pred_region
        _
      $region28: #{pointnet_sa_forward.3} parent=11 // pred_fallthru
        _
    $region12: #{pointnet_sa_forward.3} parent=5 // pred_fallthru
      _
    %p199 = scmp.lt.s32.totalorder %s11, 8
    // Predicated region
    $region29: #{pointnet_sa_forward.3} parent=5 // pred_check
      %p200 = pneg %p199
    $region30: #{pointnet_sa_forward.3} parent=5 // pred_check_branch
      %202 = sbr.rel (%p200) target = $region32
    $region31: #{pointnet_sa_forward.3} parent=5 // pred_region
      // Predicated region
      $region33: #{pointnet_sa_forward.3} parent=31 // pred_check
        %p203 = pneg %p54
      $region34: #{pointnet_sa_forward.3} parent=31 // pred_check_branch
        %205 = sbr.rel (%p203) target = $region36
      $region35: #{pointnet_sa_forward.3} parent=31 // pred_region
        %p206 = scmp.lt.s32.totalorder %s18, 1
        %s207 = scalar_select %p206, %s18, 1
        %p208 = scmp.lt.s32.totalorder %s20, 3
        %s209 = scalar_select %p208, %s20, 3
        %p210 = scmp.lt.s32.totalorder %s19, 0
        %s211 = scalar_select %p210, %s19, 0
        %s212 = smul.addr %s209, 4
        %s213 = sadd.s32 %s211, %s212
        %s214 = smul.addr %s207, 16
        %s215 = sadd.s32 %s213, %s214
        %s216 = smul.addr %s215, 4
        %s217 = scalar_lea.vmem %s0, %s216
      $region36: #{pointnet_sa_forward.3} parent=31 // pred_fallthru
        _
    $region32: #{pointnet_sa_forward.3} parent=5 // pred_fallthru
      _
    %p218 = scmp.le.s32.totalorder 1, %s11
    %p219 = scmp.lt.s32.totalorder %s11, 9
    %p220 = pnand %p218, %p219
    %p221 = pneg %p220
    // Predicated region
    $region37: #{pointnet_sa_forward.3} parent=5 // pred_check
      _
    $region38: #{pointnet_sa_forward.3} parent=5 // pred_check_branch
      %223 = sbr.rel (%p220) target = $region40
    $region39: #{pointnet_sa_forward.3} parent=5 // pred_region
      %s224 = ssub.s32 %s11, 1
      %p225 = scmp.lt.s32.totalorder %s21, 1
      %s226 = scalar_select %p225, %s21, 1
      %p227 = scmp.lt.s32.totalorder %s23, 3
      %s228 = scalar_select %p227, %s23, 3
      %p229 = scmp.lt.s32.totalorder %s22, 0
      %s230 = scalar_select %p229, %s22, 0
      %s231 = smul.addr %s228, 4
      %s232 = sadd.s32 %s230, %s231
      %s233 = smul.addr %s226, 16
      %s234 = sadd.s32 %s232, %s233
      %s235 = smul.addr %s234, 4
      %s236 = scalar_lea.vmem %s0, %s235
      %p237 = pneg %p60
      %p238 = pneg %p57
      %p239 = pneg %p81
      %p240 = pneg %p78
      %p241 = pneg %p102
      %p242 = pneg %p99
      %p243 = pneg %p123
      %p244 = pneg %p120
      %p245 = pneg %p144
      %p246 = pneg %p141
      %p247 = pneg %p172
      %p248 = pneg %p169
      %p249 = scmp.lt.s32.totalorder %s21, 1
      %s250 = scalar_select %p249, %s21, 1
      %p251 = scmp.lt.s32.totalorder %s22, 0
      %s252 = scalar_select %p251, %s22, 0
      %s253 = smul.addr %s250, 4
      %s254 = sadd.s32 %s252, %s253
      %s255 = smul.addr %s254, 8
      %s256 = scalar_lea.vmem %s5, %s255
      %p257 = scmp.lt.s32.totalorder %s21, 1
      %s258 = scalar_select %p257, %s21, 1
      %p259 = scmp.lt.s32.totalorder %s23, 3
      %s260 = scalar_select %p259, %s23, 3
      %p261 = scmp.lt.s32.totalorder %s22, 0
      %s262 = scalar_select %p261, %s22, 0
      %s263 = smul.addr %s260, 4
      %s264 = sadd.s32 %s262, %s263
      %s265 = smul.addr %s258, 16
      %s266 = sadd.s32 %s264, %s265
      %s267 = smul.addr %s266, 4
      %s268 = scalar_lea.vmem %s0, %s267
      %p269 = scmp.lt.s32.totalorder %s21, 1
      %s270 = scalar_select %p269, %s21, 1
      %p271 = scmp.lt.s32.totalorder %s22, 0
      %s272 = scalar_select %p271, %s22, 0
      %s273 = smul.addr %s270, 4
      %s274 = sadd.s32 %s272, %s273
      %s275 = smul.addr %s274, 8
      %s276 = scalar_lea.vmem %s5, %s275
      %p278 = scmp.eq.s32.totalorder %s23, 0
      // Predicated region
      $region41: #{pointnet_sa_forward.3} parent=39 // pred_check
        %p279 = pneg %p278
      $region42: #{pointnet_sa_forward.3} parent=39 // pred_check_branch
        %281 = sbr.rel (%p279) target = $region44
      $region43: #{pointnet_sa_forward.3} parent=39 // pred_region
        %282 = vst [vmem:[#allocation2] sm:$0xff] 0.0
        %283 = vst [vmem:[#allocation2 + $0x8] sm:$0xff] 0.0
        %284 = vst [vmem:[#allocation2 + $0x10] sm:$0xff] 0.0
        %285 = vst [vmem:[#allocation2 + $0x18] sm:$0xff] 0.0
      $region44: #{pointnet_sa_forward.3} parent=39 // pred_fallthru
        _
      %v286 = vld [vmem:[%s268] sm:$0xf]
      %v287 = vld [vmem:[%s268 + $0x4] sm:$0xf]
      %v288 = vld [vmem:[%s268 + $0x8] sm:$0xf]
      %v289 = vld [vmem:[%s268 + $0xc] sm:$0xf]
      %v290 = vld [vmem:[%s1] sm:$0xf]
      %v291 = vld [vmem:[%s1 + $0x4] sm:$0xf]
      %v292 = vld [vmem:[%s1 + $0x8] sm:$0xf]
      %v293 = vld [vmem:[%s1 + $0xc] sm:$0xf]
      %v294 = vld [vmem:[%s1 + $0x10] sm:$0xf]
      %v295 = vld [vmem:[%s1 + $0x14] sm:$0xf]
      %v296 = vld [vmem:[%s1 + $0x18] sm:$0xf]
      %v297 = vld [vmem:[%s1 + $0x1c] sm:$0xf]
      %v298 = vld [vmem:[%s2] sm:$0xff]
      %v299 = vld [vmem:[%s2 + $0x8] sm:$0xff]
      %v300 = vld [vmem:[%s2 + $0x10] sm:$0xff]
      %v301 = vld [vmem:[%s2 + $0x18] sm:$0xff]
      %v302 = vld [vmem:[%s2 + $0x20] sm:$0xff]
      %v303 = vld [vmem:[%s2 + $0x28] sm:$0xff]
      %v304 = vld [vmem:[%s2 + $0x30] sm:$0xff]
      %v305 = vld [vmem:[%s2 + $0x38] sm:$0xff]
      %307 = vset.pattern.permute.xlu0 0
      %308 = vperm.xlu0 %307, %v298
      %v309 = vpop.permute.xlu0 %308
      %312 = vset.pattern.permute.xlu0 0
      %313 = vperm.xlu0 %312, %v299
      %v314 = vpop.permute.xlu0 %313
      %317 = vset.pattern.permute.xlu0 0
      %318 = vperm.xlu0 %317, %v300
      %v319 = vpop.permute.xlu0 %318
      %322 = vset.pattern.permute.xlu0 0
      %323 = vperm.xlu0 %322, %v301
      %v324 = vpop.permute.xlu0 %323
      %327 = vset.pattern.permute.xlu0 0
      %328 = vperm.xlu0 %327, %v302
      %v329 = vpop.permute.xlu0 %328
      %332 = vset.pattern.permute.xlu0 0
      %333 = vperm.xlu0 %332, %v303
      %v334 = vpop.permute.xlu0 %333
      %337 = vset.pattern.permute.xlu0 0
      %338 = vperm.xlu0 %337, %v304
      %v339 = vpop.permute.xlu0 %338
      %342 = vset.pattern.permute.xlu0 0
      %343 = vperm.xlu0 %342, %v305
      %v344 = vpop.permute.xlu0 %343
      %v354 = vunpack.c.l.b16 %v290
      %v355 = vunpack.c.l.b16 %v291
      %v356 = vunpack.c.l.b16 %v292
      %v357 = vunpack.c.l.b16 %v293
      %v358 = vunpack.c.l.b16 %v294
      %v359 = vunpack.c.l.b16 %v295
      %v360 = vunpack.c.l.b16 %v296
      %v361 = vunpack.c.l.b16 %v297
      %v362 = vpack.c.b16 %v355, %v354
      %v363 = vpack.c.b16 %v357, %v356
      %v364 = vpack.c.b16 %v359, %v358
      %v365 = vpack.c.b16 %v361, %v360
      %v370 = vunpack.c.l.b16 %v286
      %v371 = vunpack.c.l.b16 %v287
      %v372 = vunpack.c.l.b16 %v288
      %v373 = vunpack.c.l.b16 %v289
      %v374 = vpack.c.b16 %v371, %v370
      %v375 = vpack.c.b16 %v373, %v372
      %vm378 = vcmask 261120
      %v380 = vsel %vm378, %v362, 0
      %v383 = vsel %vm378, %v363, 0
      %v386 = vsel %vm378, %v364, 0
      %v389 = vsel %vm378, %v365, 0
      %391 = vmatprep.subr.bf16.mxu0 0
      %392 = vmatpush1.bf16.msra.mxu0 %v374
      %393 = vmatprep.subr.bf16.mxu0 0
      %394 = vmatpush1.bf16.msra.mxu0 %v375
      %395 = vmatprep.subr.bf16.mxu0 0
      %396 = vmatpush1.bf16.msra.mxu0 0
      %397 = vmatprep.subr.bf16.mxu0 0
      %398 = vmatpush1.bf16.msra.mxu0 0
      %399 = vmatprep.subr.bf16.mxu0 0
      %400 = vmatpush1.bf16.msra.mxu0 0
      %401 = vmatprep.subr.bf16.mxu0 0
      %402 = vmatpush1.bf16.msra.mxu0 0
      %403 = vmatprep.subr.bf16.mxu0 0
      %404 = vmatpush1.bf16.msra.mxu0 0
      %405 = vmatprep.subr.bf16.mxu0 0
      %406 = vmatpush1.bf16.msra.mxu0 0
      %407 = vmatprep.subr.bf16.mxu0 0
      %408 = vmatpush1.bf16.msra.mxu0 0
      %409 = vmatprep.subr.bf16.mxu0 0
      %410 = vmatpush1.bf16.msra.mxu0 0
      %411 = vmatprep.subr.bf16.mxu0 0
      %412 = vmatpush1.bf16.msra.mxu0 0
      %413 = vmatprep.subr.bf16.mxu0 0
      %414 = vmatpush1.bf16.msra.mxu0 0
      %415 = vmatprep.subr.bf16.mxu0 0
      %416 = vmatpush1.bf16.msra.mxu0 0
      %417 = vmatprep.subr.bf16.mxu0 0
      %418 = vmatpush1.bf16.msra.mxu0 0
      %419 = vmatprep.subr.bf16.mxu0 0
      %420 = vmatpush1.bf16.msra.mxu0 0
      %421 = vmatprep.subr.bf16.mxu0 0
      %422 = vmatpush1.bf16.msra.mxu0 0
      %423 = vmatprep.mubr.bf16.mxu0 0
      %424 = vmatmul.mubr.bf16.gmra.mrb[0].mxu0 %v380
      %v425 = vpop.f32.mrb[0].mxu0
      %v426 = vadd.f32 %v309, %v425
      %v427 = vpop.f32.mrb[0].mxu0
      %v428 = vpop.f32.mrb[0].mxu0
      %v429 = vadd.f32 %v314, %v428
      %v430 = vpop.f32.mrb[0].mxu0
      %431 = vmatprep.mubr.bf16.mxu0 0
      %432 = vmatmul.mubr.bf16.gmra.mrb[0].mxu0 %v383
      %v433 = vpop.f32.mrb[0].mxu0
      %v434 = vadd.f32 %v319, %v433
      %v435 = vpop.f32.mrb[0].mxu0
      %v436 = vpop.f32.mrb[0].mxu0
      %v437 = vadd.f32 %v324, %v436
      %v438 = vpop.f32.mrb[0].mxu0
      %439 = vmatprep.mubr.bf16.mxu0 0
      %440 = vmatmul.mubr.bf16.gmra.mrb[0].mxu0 %v386
      %v441 = vpop.f32.mrb[0].mxu0
      %v442 = vadd.f32 %v329, %v441
      %v443 = vpop.f32.mrb[0].mxu0
      %v444 = vpop.f32.mrb[0].mxu0
      %v445 = vadd.f32 %v334, %v444
      %v446 = vpop.f32.mrb[0].mxu0
      %447 = vmatprep.mubr.bf16.mxu0 0
      %448 = vmatmul.mubr.bf16.gmra.mrb[0].mxu0 %v389
      %v449 = vpop.f32.mrb[0].mxu0
      %v450 = vadd.f32 %v339, %v449
      %v451 = vpop.f32.mrb[0].mxu0
      %v452 = vpop.f32.mrb[0].mxu0
      %v453 = vadd.f32 %v344, %v452
      %v454 = vpop.f32.mrb[0].mxu0
      %455 = vdwg.mxu0
      %v456 = vmax.f32 %v426, 0.0
      %v457 = vmax.f32 %v429, 0.0
      %v458 = vmax.f32 %v434, 0.0
      %v459 = vmax.f32 %v437, 0.0
      %v460 = vmax.f32 %v442, 0.0
      %v461 = vmax.f32 %v445, 0.0
      %v462 = vmax.f32 %v450, 0.0
      %v463 = vmax.f32 %v453, 0.0
      %v464 = vpack.c.bf16 %v457, %v456
      %v465 = vpack.c.bf16 %v459, %v458
      %v466 = vpack.c.bf16 %v461, %v460
      %v467 = vpack.c.bf16 %v463, %v462
      %v468 = vld [vmem:[%s3] sm:$0xf]
      %v469 = vld [vmem:[%s3 + $0x4] sm:$0xf]
      %v470 = vld [vmem:[%s3 + $0x8] sm:$0xf]
      %v471 = vld [vmem:[%s3 + $0xc] sm:$0xf]
      %v472 = vld [vmem:[%s3 + $0x10] sm:$0xf]
      %v473 = vld [vmem:[%s3 + $0x14] sm:$0xf]
      %v474 = vld [vmem:[%s3 + $0x18] sm:$0xf]
      %v475 = vld [vmem:[%s3 + $0x1c] sm:$0xf]
      %v476 = vld [vmem:[%s3 + $0x20] sm:$0xf]
      %v477 = vld [vmem:[%s3 + $0x24] sm:$0xf]
      %v478 = vld [vmem:[%s3 + $0x28] sm:$0xf]
      %v479 = vld [vmem:[%s3 + $0x2c] sm:$0xf]
      %v480 = vld [vmem:[%s3 + $0x30] sm:$0xf]
      %v481 = vld [vmem:[%s3 + $0x34] sm:$0xf]
      %v482 = vld [vmem:[%s3 + $0x38] sm:$0xf]
      %v483 = vld [vmem:[%s3 + $0x3c] sm:$0xf]
      %v484 = vld [vmem:[%s4] sm:$0xff]
      %v485 = vld [vmem:[%s4 + $0x8] sm:$0xff]
      %v486 = vld [vmem:[%s4 + $0x10] sm:$0xff]
      %v487 = vld [vmem:[%s4 + $0x18] sm:$0xff]
      %v488 = vld [vmem:[%s4 + $0x20] sm:$0xff]
      %v489 = vld [vmem:[%s4 + $0x28] sm:$0xff]
      %v490 = vld [vmem:[%s4 + $0x30] sm:$0xff]
      %v491 = vld [vmem:[%s4 + $0x38] sm:$0xff]
      %v492 = vld [vmem:[%s4 + $0x40] sm:$0xff]
      %v493 = vld [vmem:[%s4 + $0x48] sm:$0xff]
      %v494 = vld [vmem:[%s4 + $0x50] sm:$0xff]
      %v495 = vld [vmem:[%s4 + $0x58] sm:$0xff]
      %v496 = vld [vmem:[%s4 + $0x60] sm:$0xff]
      %v497 = vld [vmem:[%s4 + $0x68] sm:$0xff]
      %v498 = vld [vmem:[%s4 + $0x70] sm:$0xff]
      %v499 = vld [vmem:[%s4 + $0x78] sm:$0xff]
      %501 = vset.pattern.permute.xlu0 0
      %502 = vperm.xlu0 %501, %v484
      %v503 = vpop.permute.xlu0 %502
      %506 = vset.pattern.permute.xlu0 0
      %507 = vperm.xlu0 %506, %v485
      %v508 = vpop.permute.xlu0 %507
      %511 = vset.pattern.permute.xlu0 0
      %512 = vperm.xlu0 %511, %v486
      %v513 = vpop.permute.xlu0 %512
      %516 = vset.pattern.permute.xlu0 0
      %517 = vperm.xlu0 %516, %v487
      %v518 = vpop.permute.xlu0 %517
      %521 = vset.pattern.permute.xlu0 0
      %522 = vperm.xlu0 %521, %v488
      %v523 = vpop.permute.xlu0 %522
      %526 = vset.pattern.permute.xlu0 0
      %527 = vperm.xlu0 %526, %v489
      %v528 = vpop.permute.xlu0 %527
      %531 = vset.pattern.permute.xlu0 0
      %532 = vperm.xlu0 %531, %v490
      %v533 = vpop.permute.xlu0 %532
      %536 = vset.pattern.permute.xlu0 0
      %537 = vperm.xlu0 %536, %v491
      %v538 = vpop.permute.xlu0 %537
      %541 = vset.pattern.permute.xlu0 0
      %542 = vperm.xlu0 %541, %v492
      %v543 = vpop.permute.xlu0 %542
      %546 = vset.pattern.permute.xlu0 0
      %547 = vperm.xlu0 %546, %v493
      %v548 = vpop.permute.xlu0 %547
      %551 = vset.pattern.permute.xlu0 0
      %552 = vperm.xlu0 %551, %v494
      %v553 = vpop.permute.xlu0 %552
      %556 = vset.pattern.permute.xlu0 0
      %557 = vperm.xlu0 %556, %v495
      %v558 = vpop.permute.xlu0 %557
      %561 = vset.pattern.permute.xlu0 0
      %562 = vperm.xlu0 %561, %v496
      %v563 = vpop.permute.xlu0 %562
      %566 = vset.pattern.permute.xlu0 0
      %567 = vperm.xlu0 %566, %v497
      %v568 = vpop.permute.xlu0 %567
      %571 = vset.pattern.permute.xlu0 0
      %572 = vperm.xlu0 %571, %v498
      %v573 = vpop.permute.xlu0 %572
      %576 = vset.pattern.permute.xlu0 0
      %577 = vperm.xlu0 %576, %v499
      %v578 = vpop.permute.xlu0 %577
      %v596 = vunpack.c.l.b16 %v468
      %v597 = vunpack.c.l.b16 %v469
      %v598 = vunpack.c.l.b16 %v470
      %v599 = vunpack.c.l.b16 %v471
      %v600 = vunpack.c.l.b16 %v472
      %v601 = vunpack.c.l.b16 %v473
      %v602 = vunpack.c.l.b16 %v474
      %v603 = vunpack.c.l.b16 %v475
      %v604 = vunpack.c.l.b16 %v476
      %v605 = vunpack.c.l.b16 %v477
      %v606 = vunpack.c.l.b16 %v478
      %v607 = vunpack.c.l.b16 %v479
      %v608 = vunpack.c.l.b16 %v480
      %v609 = vunpack.c.l.b16 %v481
      %v610 = vunpack.c.l.b16 %v482
      %v611 = vunpack.c.l.b16 %v483
      %v612 = vpack.c.b16 %v597, %v596
      %v613 = vpack.c.b16 %v599, %v598
      %v614 = vpack.c.b16 %v601, %v600
      %v615 = vpack.c.b16 %v603, %v602
      %v616 = vpack.c.b16 %v605, %v604
      %v617 = vpack.c.b16 %v607, %v606
      %v618 = vpack.c.b16 %v609, %v608
      %v619 = vpack.c.b16 %v611, %v610
      %vm620 = vcmask 523264
      %v622 = vsel %vm620, %v612, 0
      %v625 = vsel %vm620, %v613, 0
      %v628 = vsel %vm620, %v614, 0
      %v631 = vsel %vm620, %v615, 0
      %v634 = vsel %vm620, %v616, 0
      %v637 = vsel %vm620, %v617, 0
      %v640 = vsel %vm620, %v618, 0
      %v643 = vsel %vm620, %v619, 0
      %645 = vmatprep.subr.bf16.mxu0 0
      %646 = vmatpush1.bf16.msra.mxu0 %v464
      %647 = vmatprep.subr.bf16.mxu0 0
      %648 = vmatpush1.bf16.msra.mxu0 %v465
      %649 = vmatprep.subr.bf16.mxu0 0
      %650 = vmatpush1.bf16.msra.mxu0 %v466
      %651 = vmatprep.subr.bf16.mxu0 0
      %652 = vmatpush1.bf16.msra.mxu0 %v467
      %653 = vmatprep.subr.bf16.mxu0 0
      %654 = vmatpush1.bf16.msra.mxu0 0
      %655 = vmatprep.subr.bf16.mxu0 0
      %656 = vmatpush1.bf16.msra.mxu0 0
      %657 = vmatprep.subr.bf16.mxu0 0
      %658 = vmatpush1.bf16.msra.mxu0 0
      %659 = vmatprep.subr.bf16.mxu0 0
      %660 = vmatpush1.bf16.msra.mxu0 0
      %661 = vmatprep.subr.bf16.mxu0 0
      %662 = vmatpush1.bf16.msra.mxu0 0
      %663 = vmatprep.subr.bf16.mxu0 0
      %664 = vmatpush1.bf16.msra.mxu0 0
      %665 = vmatprep.subr.bf16.mxu0 0
      %666 = vmatpush1.bf16.msra.mxu0 0
      %667 = vmatprep.subr.bf16.mxu0 0
      %668 = vmatpush1.bf16.msra.mxu0 0
      %669 = vmatprep.subr.bf16.mxu0 0
      %670 = vmatpush1.bf16.msra.mxu0 0
      %671 = vmatprep.subr.bf16.mxu0 0
      %672 = vmatpush1.bf16.msra.mxu0 0
      %673 = vmatprep.subr.bf16.mxu0 0
      %674 = vmatpush1.bf16.msra.mxu0 0
      %675 = vmatprep.subr.bf16.mxu0 0
      %676 = vmatpush1.bf16.msra.mxu0 0
      %677 = vmatprep.mubr.bf16.mxu0 0
      %678 = vmatmul.mubr.bf16.gmra.mrb[0].mxu0 %v622
      %v679 = vpop.f32.mrb[0].mxu0
      %v680 = vadd.f32 %v503, %v679
      %v681 = vpop.f32.mrb[0].mxu0
      %v682 = vpop.f32.mrb[0].mxu0
      %v683 = vadd.f32 %v508, %v682
      %v684 = vpop.f32.mrb[0].mxu0
      %685 = vmatprep.mubr.bf16.mxu0 0
      %686 = vmatmul.mubr.bf16.gmra.mrb[0].mxu0 %v625
      %v687 = vpop.f32.mrb[0].mxu0
      %v688 = vadd.f32 %v513, %v687
      %v689 = vpop.f32.mrb[0].mxu0
      %v690 = vpop.f32.mrb[0].mxu0
      %v691 = vadd.f32 %v518, %v690
      %v692 = vpop.f32.mrb[0].mxu0
      %693 = vmatprep.mubr.bf16.mxu0 0
      %694 = vmatmul.mubr.bf16.gmra.mrb[0].mxu0 %v628
      %v695 = vpop.f32.mrb[0].mxu0
      %v696 = vadd.f32 %v523, %v695
      %v697 = vpop.f32.mrb[0].mxu0
      %v698 = vpop.f32.mrb[0].mxu0
      %v699 = vadd.f32 %v528, %v698
      %v700 = vpop.f32.mrb[0].mxu0
      %701 = vmatprep.mubr.bf16.mxu0 0
      %702 = vmatmul.mubr.bf16.gmra.mrb[0].mxu0 %v631
      %v703 = vpop.f32.mrb[0].mxu0
      %v704 = vadd.f32 %v533, %v703
      %v705 = vpop.f32.mrb[0].mxu0
      %v706 = vpop.f32.mrb[0].mxu0
      %v707 = vadd.f32 %v538, %v706
      %v708 = vpop.f32.mrb[0].mxu0
      %709 = vmatprep.mubr.bf16.mxu0 0
      %710 = vmatmul.mubr.bf16.gmra.mrb[0].mxu0 %v634
      %v711 = vpop.f32.mrb[0].mxu0
      %v712 = vadd.f32 %v543, %v711
      %v713 = vpop.f32.mrb[0].mxu0
      %v714 = vpop.f32.mrb[0].mxu0
      %v715 = vadd.f32 %v548, %v714
      %v716 = vpop.f32.mrb[0].mxu0
      %717 = vmatprep.mubr.bf16.mxu0 0
      %718 = vmatmul.mubr.bf16.gmra.mrb[0].mxu0 %v637
      %v719 = vpop.f32.mrb[0].mxu0
      %v720 = vadd.f32 %v553, %v719
      %v721 = vpop.f32.mrb[0].mxu0
      %v722 = vpop.f32.mrb[0].mxu0
      %v723 = vadd.f32 %v558, %v722
      %v724 = vpop.f32.mrb[0].mxu0
      %725 = vmatprep.mubr.bf16.mxu0 0
      %726 = vmatmul.mubr.bf16.gmra.mrb[0].mxu0 %v640
      %v727 = vpop.f32.mrb[0].mxu0
      %v728 = vadd.f32 %v563, %v727
      %v729 = vpop.f32.mrb[0].mxu0
      %v730 = vpop.f32.mrb[0].mxu0
      %v731 = vadd.f32 %v568, %v730
      %v732 = vpop.f32.mrb[0].mxu0
      %733 = vmatprep.mubr.bf16.mxu0 0
      %734 = vmatmul.mubr.bf16.gmra.mrb[0].mxu0 %v643
      %v735 = vpop.f32.mrb[0].mxu0
      %v736 = vadd.f32 %v573, %v735
      %v737 = vpop.f32.mrb[0].mxu0
      %v738 = vpop.f32.mrb[0].mxu0
      %v739 = vadd.f32 %v578, %v738
      %v740 = vpop.f32.mrb[0].mxu0
      %741 = vdwg.mxu0
      %v742 = vmax.f32 %v680, 0.0
      %v743 = vmax.f32 %v683, 0.0
      %v744 = vmax.f32 %v688, 0.0
      %v745 = vmax.f32 %v691, 0.0
      %v746 = vmax.f32 %v696, 0.0
      %v747 = vmax.f32 %v699, 0.0
      %v748 = vmax.f32 %v704, 0.0
      %v749 = vmax.f32 %v707, 0.0
      %v750 = vmax.f32 %v712, 0.0
      %v751 = vmax.f32 %v715, 0.0
      %v752 = vmax.f32 %v720, 0.0
      %v753 = vmax.f32 %v723, 0.0
      %v754 = vmax.f32 %v728, 0.0
      %v755 = vmax.f32 %v731, 0.0
      %v756 = vmax.f32 %v736, 0.0
      %v757 = vmax.f32 %v739, 0.0
      %v758 = vmax.f32 %v742, %v746
      %v759 = vmax.f32 %v743, %v747
      %v760 = vmax.f32 %v744, %v748
      %v761 = vmax.f32 %v745, %v749
      %v762 = vmax.f32 %v758, %v750
      %v763 = vmax.f32 %v759, %v751
      %v764 = vmax.f32 %v760, %v752
      %v765 = vmax.f32 %v761, %v753
      %v766 = vmax.f32 %v762, %v754
      %v767 = vmax.f32 %v763, %v755
      %v768 = vmax.f32 %v764, %v756
      %v769 = vmax.f32 %v765, %v757
      %v770 = vld [vmem:[#allocation2] sm:$0xff]
      %v771 = vld [vmem:[#allocation2 + $0x8] sm:$0xff]
      %v772 = vld [vmem:[#allocation2 + $0x10] sm:$0xff]
      %v773 = vld [vmem:[#allocation2 + $0x18] sm:$0xff]
      %v774 = vmax.f32 %v770, %v766
      %v775 = vmax.f32 %v771, %v767
      %v776 = vmax.f32 %v772, %v768
      %v777 = vmax.f32 %v773, %v769
      %778 = vst [vmem:[#allocation2] sm:$0xff] %v774
      %779 = vst [vmem:[#allocation2 + $0x8] sm:$0xff] %v775
      %780 = vst [vmem:[#allocation2 + $0x10] sm:$0xff] %v776
      %781 = vst [vmem:[#allocation2 + $0x18] sm:$0xff] %v777
      %p782 = scmp.eq.s32.totalorder %s23, 3
      // Predicated region
      $region45: #{pointnet_sa_forward.3} parent=39 // pred_check
        %p783 = pneg %p782
      $region46: #{pointnet_sa_forward.3} parent=39 // pred_check_branch
        %785 = sbr.rel (%p783) target = $region48
      $region47: #{pointnet_sa_forward.3} parent=39 // pred_region
        %v786 = vld [vmem:[#allocation2] sm:$0xff]
        %v787 = vld [vmem:[#allocation2 + $0x8] sm:$0xff]
        %v788 = vld [vmem:[#allocation2 + $0x10] sm:$0xff]
        %v789 = vld [vmem:[#allocation2 + $0x18] sm:$0xff]
        %790 = vst [vmem:[%s276] sm:$0xff] %v786
        %791 = vst [vmem:[%s276 + $0x8] sm:$0xff] %v787
        %792 = vst [vmem:[%s276 + $0x10] sm:$0xff] %v788
        %793 = vst [vmem:[%s276 + $0x18] sm:$0xff] %v789
      $region48: #{pointnet_sa_forward.3} parent=39 // pred_fallthru
        _
      %p794 = scmp.lt.s32.totalorder %s21, 1
      %s795 = scalar_select %p794, %s21, 1
      %p796 = scmp.lt.s32.totalorder %s22, 0
      %s797 = scalar_select %p796, %s22, 0
      %s798 = smul.addr %s795, 4
      %s799 = sadd.s32 %s797, %s798
      %s800 = smul.addr %s799, 8
      %s801 = scalar_lea.vmem %s5, %s800
      // Predicated region
      $region49: #{pointnet_sa_forward.3} parent=39 // pred_check
        %p802 = pneg %p169
      $region50: #{pointnet_sa_forward.3} parent=39 // pred_check_branch
        %804 = sbr.rel (%p802) target = $region52
      $region51: #{pointnet_sa_forward.3} parent=39 // pred_region
        _
      $region52: #{pointnet_sa_forward.3} parent=39 // pred_fallthru
        _
    $region40: #{pointnet_sa_forward.3} parent=5 // pred_fallthru
      _
    %p805 = scmp.le.s32.totalorder 2, %s11
    // Predicated region
    $region53: #{pointnet_sa_forward.3} parent=5 // pred_check
      %p806 = pneg %p805
    $region54: #{pointnet_sa_forward.3} parent=5 // pred_check_branch
      %808 = sbr.rel (%p806) target = $region56
    $region55: #{pointnet_sa_forward.3} parent=5 // pred_region
      %s809 = ssub.s32 %s11, 2
      // Predicated region
      $region57: #{pointnet_sa_forward.3} parent=55 // pred_check
        %p810 = pneg %p175
      $region58: #{pointnet_sa_forward.3} parent=55 // pred_check_branch
        %812 = sbr.rel (%p810) target = $region60
      $region59: #{pointnet_sa_forward.3} parent=55 // pred_region
        %p813 = scmp.lt.s32.totalorder %s24, 1
        %s814 = scalar_select %p813, %s24, 1
        %p815 = scmp.lt.s32.totalorder %s25, 0
        %s816 = scalar_select %p815, %s25, 0
        %s817 = smul.addr %s814, 4
        %s818 = sadd.s32 %s816, %s817
        %s819 = smul.addr %s818, 8
        %s820 = scalar_lea.vmem %s5, %s819
      $region60: #{pointnet_sa_forward.3} parent=55 // pred_fallthru
        _
    $region56: #{pointnet_sa_forward.3} parent=5 // pred_fallthru
      _
  $region6: #{pointnet_sa_forward.3} parent=0 // loop_footer
    %s15 = sadd.s32 1, %s11
  $region7: #{pointnet_sa_forward.3} parent=0 // loop_footer_branch
    %10 = sbr.rel target = $region3
  $region8: #{pointnet_sa_forward.3} parent=0 // loop_exit
    _

</llo_original>
